<compile_context>
chip_gen: v5e
topology: v5e:2x2
jax: 0.10.0
libtpu: 0.0.40
codegen_flags: <defaults>
</compile_context>

<pallas_src>
import jax
import jax.numpy as jnp
from jax import lax
from jax.experimental import pallas as pl
from jax.experimental.pallas import tpu as pltpu


NEG_INF = -1e30    # finite "minus infinity": keeps masked lanes NaN-free
EXP_CLAMP = 80.0   # cap on correction exponents -> never overflows to inf/NaN


def _make_clip_loss_kernel(*, n_actual, n_pad, tile, ni_per, needs_mask,
                           resident_text):
    nj = n_pad // tile

    def kernel(scale_ref, img_ref, txt_ref,
               rowsum_ref, mcol_ref, lcol_ref,
               m_row, l_row, img_s):
        c = pl.program_id(0)       # split index ("parallel" -> megacore on v7x)
        ii = pl.program_id(1)      # row tile within this split
        j = pl.program_id(2)       # col tile (row-LSE reduction axis)
        i_glob = c * ni_per + ii   # global row-tile index

        # ---- per-split init: col-LSE state + row-LSE partial sum live in the
        #      per-split output blocks (constant index map per split) ----
        @pl.when(jnp.logical_and(ii == 0, j == 0))
        def _init_split():
            rowsum_ref[...] = jnp.zeros_like(rowsum_ref)
            mcol_ref[...] = jnp.full_like(mcol_ref, NEG_INF)
            lcol_ref[...] = jnp.zeros_like(lcol_ref)

        # ---- per-row-tile init + hoisted scale/cast of the image block ----
        @pl.when(j == 0)
        def _init_row_tile():
            m_row[...] = jnp.full_like(m_row, NEG_INF)
            l_row[...] = jnp.zeros_like(l_row)
            scale = scale_ref[0, 0]
            img_s[...] = (img_ref[...].astype(jnp.float32)
                          * scale).astype(img_s.dtype)

        j0 = pl.multiple_of(j * tile, tile)
        if resident_text:
            txt = txt_ref[pl.ds(j0, tile), :]        # slice of resident text
        else:
            txt = txt_ref[...]                       # streamed (tile, D) block

        # logits tile = (scale*img_i) @ txt_j^T  (contract last dims, f32 acc)
        s = lax.dot_general(
            img_s[...], txt,
            dimension_numbers=(((1,), (1,)), ((), ())),
            preferred_element_type=jnp.float32,
        )                                            # (T, T) f32

        if needs_mask:
            # additive boundary biases (2 broadcast adds, cheaper than 2-D mask)
            rid = i_glob * tile + lax.broadcasted_iota(jnp.int32, (tile, 1), 0)
            cid = j * tile + lax.broadcasted_iota(jnp.int32, (1, tile), 1)
            row_bias = jnp.where(rid < n_actual, 0.0, NEG_INF)   # (T, 1)
            col_bias = jnp.where(cid < n_actual, 0.0, NEG_INF)   # (1, T)
            s = s + row_bias + col_bias

        # ---- single-exp dual online LSE (block-max reference) ----
        row_max = jnp.max(s, axis=1, keepdims=True)   # (T, 1)
        col_max = jnp.max(s, axis=0, keepdims=True)   # (1, T)
        bm = jnp.max(row_max)                         # scalar block max
        e = jnp.exp(s - bm)                           # the ONE (T, T) exp
        e_rsum = jnp.sum(e, axis=1, keepdims=True)    # (T, 1)
        e_csum = jnp.sum(e, axis=0, keepdims=True)    # (1, T)
        # (If the XLU becomes binding, e_rsum/e_csum can be moved to the MXU via
        #  e @ ones and ones @ e.)

        # image->text CE: row LSE, reduced over the j axis
        m_prev = m_row[...]
        m_new = jnp.maximum(m_prev, row_max)
        corr_r = jnp.exp(jnp.minimum(bm - m_new, EXP_CLAMP))
        l_row[...] = l_row[...] * jnp.exp(m_prev - m_new) + e_rsum * corr_r
        m_row[...] = m_new

        # text->image CE: col LSE, reduced over row tiles within this split.
        # State lives directly in the per-split output blocks (VMEM-resident).
        mcol = mcol_ref.at[0]                         # view: (1, n_pad)
        lcol = lcol_ref.at[0]
        mc_prev = mcol[:, pl.ds(j0, tile)]            # (1, T)
        lc_prev = lcol[:, pl.ds(j0, tile)]
        mc_new = jnp.maximum(mc_prev, col_max)
        corr_c = jnp.exp(jnp.minimum(bm - mc_new, EXP_CLAMP))
        lcol[:, pl.ds(j0, tile)] = (lc_prev * jnp.exp(mc_prev - mc_new)
                                    + e_csum * corr_c)
        mcol[:, pl.ds(j0, tile)] = mc_new

        # finalize this row tile's LSEs into the per-split scalar partial
        @pl.when(j == nj - 1)
        def _row_final():
            lse_r = m_row[...] + jnp.log(l_row[...])  # (T, 1)
            if needs_mask:
                rid2 = (i_glob * tile
                        + lax.broadcasted_iota(jnp.int32, (tile, 1), 0))
                lse_r = jnp.where(rid2 < n_actual, lse_r, 0.0)
            rowsum_ref[...] = rowsum_ref[...] + jnp.sum(lse_r)

    return kernel


def _vmem_limit_bytes():
    """96 MiB on 128-MiB parts (v5e/v6e), 48 MiB on 64-MiB parts (v7x)."""
    try:
        cap = int(pltpu.get_tpu_info().vmem_capacity_bytes)
    except Exception:
        cap = 64 * 1024 * 1024
    return min(100 * 1024 * 1024, cap * 3 // 4)


def clip_loss(image_features, text_features, logit_scale, *,
              tile=256, matmul_dtype=jnp.bfloat16, num_splits=None,
              resident_text=None):
    """world_size == 1 ClipLoss forward. Returns a scalar f32 loss."""
    n, d = image_features.shape
    assert text_features.shape == (n, d)

    img_f32 = image_features.astype(jnp.float32)
    txt_f32 = text_features.astype(jnp.float32)
    scale_f = jnp.float32(logit_scale)

    # diagonal term: sum_r logits[r, r] = scale * sum_r <img[r], txt[r]>
    # (tiny O(N*D) op, moved out of the kernel's hot loop)
    diag_sum = scale_f * jnp.sum(img_f32 * txt_f32)

    # matmul operands (bf16 halves the HBM text stream; f32 accumulation kept)
    img = image_features.astype(matmul_dtype)
    txt = text_features.astype(matmul_dtype)

    # pad batch to a tile multiple; padded rows/cols are masked in-kernel
    n_pad = ((n + tile - 1) // tile) * tile
    needs_mask = n_pad != n
    if needs_mask:
        pad = ((0, n_pad - n), (0, 0))
        img = jnp.pad(img, pad)
        txt = jnp.pad(txt, pad)

    ni = nj = n_pad // tile
    if num_splits is None:
        num_splits = 2 if (ni >= 2 and ni % 2 == 0) else 1
    assert ni % num_splits == 0
    ni_per = ni // num_splits

    itemsize = jnp.dtype(matmul_dtype).itemsize
    vmem_limit = _vmem_limit_bytes()
    if resident_text is None:
        # keep text fully VMEM-resident when it comfortably fits the budget
        est = (2 * n_pad * d * itemsize            # resident text (2 buffers)
               + 2 * tile * d * itemsize           # image tile (double-buffered)
               + tile * d * itemsize               # hoisted scaled-image scratch
               + 4 * n_pad * 4 + (1 << 20))        # small outputs + slack
        resident_text = est <= int(0.6 * vmem_limit)

    if resident_text:
        txt_spec = pl.BlockSpec((n_pad, d), lambda c, i, j: (0, 0))
    else:
        # TODO(synk): consider pipeline_mode=pl.Buffered(3) here if the text DMA
        # is still exposed after enlarging tiles.
        txt_spec = pl.BlockSpec((tile, d), lambda c, i, j: (j, 0))

    kernel = _make_clip_loss_kernel(
        n_actual=n, n_pad=n_pad, tile=tile, ni_per=ni_per,
        needs_mask=needs_mask, resident_text=resident_text)

    grid_spec = pltpu.PrefetchScalarGridSpec(
        num_scalar_prefetch=0,
        grid=(num_splits, ni_per, nj),
        in_specs=[
            pl.BlockSpec(memory_space=pltpu.MemorySpace.SMEM),             # scale
            pl.BlockSpec((tile, d), lambda c, i, j: (c * ni_per + i, 0)),  # image
            txt_spec,                                                      # text
        ],
        out_specs=[
            pl.BlockSpec((1, 1, 128),   lambda c, i, j: (c, 0, 0)),  # row-LSE sums
            pl.BlockSpec((1, 1, n_pad), lambda c, i, j: (c, 0, 0)),  # col running max
            pl.BlockSpec((1, 1, n_pad), lambda c, i, j: (c, 0, 0)),  # col running sum
        ],
        scratch_shapes=[
            pltpu.VMEM((tile, 1), jnp.float32),    # m_row
            pltpu.VMEM((tile, 1), jnp.float32),    # l_row
            pltpu.VMEM((tile, d), matmul_dtype),   # scaled image block (hoisted)
        ],
    )

    text_reads = (num_splits if resident_text else ni) * n_pad * d * itemsize
    cost = pl.CostEstimate(
        flops=2 * n_pad * n_pad * d + 10 * n_pad * n_pad,
        transcendentals=n_pad * n_pad + 6 * n_pad * ni,
        bytes_accessed=(n_pad * d * itemsize + text_reads
                        + num_splits * (2 * n_pad + 128) * 4),
    )

    rowsum, m_col, l_col = pl.pallas_call(
        kernel,
        out_shape=[
            jax.ShapeDtypeStruct((num_splits, 1, 128), jnp.float32),
            jax.ShapeDtypeStruct((num_splits, 1, n_pad), jnp.float32),
            jax.ShapeDtypeStruct((num_splits, 1, n_pad), jnp.float32),
        ],
        grid_spec=grid_spec,
        compiler_params=pltpu.CompilerParams(
            # split axis is "parallel" (its state is privatized per split and
            # merged below); the other two axes carry reductions -> "arbitrary"
            dimension_semantics=("parallel", "arbitrary", "arbitrary"),
            vmem_limit_bytes=vmem_limit,
        ),
        cost_estimate=cost,
    )(scale_f.reshape(1, 1), img, txt)

    # ---- tiny O(N) combine of the per-split partials ----
    row_lse_sum = jnp.sum(rowsum[:, 0, 0])
    m = m_col[:, 0, :]                                  # (S, n_pad)
    l = l_col[:, 0, :]
    m_c = jnp.max(m, axis=0)
    l_c = jnp.sum(l * jnp.exp(m - m_c[None, :]), axis=0)
    lse_col = m_c + jnp.log(l_c)
    valid = jnp.arange(n_pad) < n
    col_lse_sum = jnp.sum(jnp.where(valid, lse_col, 0.0))

    return (row_lse_sum + col_lse_sum - 2.0 * diag_sum) / (2.0 * n)


def clip_loss_ref(image_features, text_features, logit_scale):
    """Pure-JAX reference (matches PyTorch ClipLoss, world_size=1)."""
    hi = jax.lax.Precision.HIGHEST
    li = logit_scale * jnp.dot(image_features, text_features.T, precision=hi)
    lt = logit_scale * jnp.dot(text_features, image_features.T, precision=hi)
    labels = jnp.arange(li.shape[0])

    def ce(logits):
        lse = jax.nn.logsumexp(logits, axis=1)
        picked = jnp.take_along_axis(logits, labels[:, None], axis=1)[:, 0]
        return jnp.mean(lse - picked)

    return 0.5 * (ce(li) + ce(lt))


def _make_inputs(key, n, d):
    k1, k2 = jax.random.split(key)
    img = jax.random.normal(k1, (n, d), dtype=jnp.float32)
    txt = jax.random.normal(k2, (n, d), dtype=jnp.float32)
    img = img / jnp.linalg.norm(img, axis=1, keepdims=True)
    txt = txt / jnp.linalg.norm(txt, axis=1, keepdims=True)
    return img, txt


if __name__ == "__main__":
    key = jax.random.PRNGKey(0)
    logit_scale = 100.0

    # (N, D, tile, matmul_dtype, resident_text, tol)
    cases = [
        (512, 128, 256, jnp.float32, None, 5e-3),   # default tile, 2-way split
        (200, 96, 128, jnp.float32, None, 5e-3),    # ragged batch: pad + mask path
        (512, 64, 128, jnp.bfloat16, None, 3e-2),   # bf16 operands, 2 row tiles/split
        (256, 64, 128, jnp.float32, False, 5e-3),   # streamed (non-resident) text
    ]
    for idx, (N, D, tile, mdt, res, tol) in enumerate(cases):
        key, sub = jax.random.split(key)
        img, txt = _make_inputs(sub, N, D)

        loss = clip_loss(img, txt, logit_scale, tile=tile, matmul_dtype=mdt,
                         resident_text=res)
        loss = jax.block_until_ready(loss)

        ref = clip_loss_ref(img, txt, logit_scale)
        assert jnp.allclose(loss, ref, rtol=tol, atol=tol), \
            (idx, float(loss), float(ref))

    print("KERNEL_OK")
</pallas_src>

<mosaic_0001>
module attributes {stable_mosaic.version = 11 : i64} {
  func.func @kernel(%arg0: i32, %arg1: i32, %arg2: i32, %arg3: memref<1x1xf32, #tpu.memory_space<smem>>, %arg4: memref<256x128xf32, #tpu.memory_space<vmem>>, %arg5: memref<512x128xf32, #tpu.memory_space<vmem>>, %arg6: memref<1x1x128xf32, #tpu.memory_space<vmem>>, %arg7: memref<1x1x512xf32, #tpu.memory_space<vmem>>, %arg8: memref<1x1x512xf32, #tpu.memory_space<vmem>>, %arg9: memref<256x1xf32, #tpu.memory_space<vmem>>, %arg10: memref<256x1xf32, #tpu.memory_space<vmem>>, %arg11: memref<256x128xf32, #tpu.memory_space<vmem>>) attributes {dimension_semantics = [#tpu.dimension_semantics<parallel>, #tpu.dimension_semantics<arbitrary>, #tpu.dimension_semantics<arbitrary>], iteration_bounds = array<i64: 2, 1, 2>, scalar_prefetch = 0 : i64, scratch_operands = 3 : i64, tpu.core_type = #tpu.core_type<tc>, window_params = [{transform_indices = @transform_0, window_bounds = array<i64: 1, 1>}, {transform_indices = @transform_1, window_bounds = array<i64: 256, 128>}, {pipeline_mode = #tpu.pipeline_mode<synchronous>, transform_indices = @transform_2, window_bounds = array<i64: 512, 128>}, {transform_indices = @transform_3, window_bounds = array<i64: 1, 1, 128>}, {transform_indices = @transform_4, window_bounds = array<i64: 1, 1, 512>}, {transform_indices = @transform_5, window_bounds = array<i64: 1, 1, 512>}]} {
    %c0_i32 = arith.constant 0 : i32
    %0 = arith.cmpi eq, %arg1, %c0_i32 : i32
    %c0_i32_0 = arith.constant 0 : i32
    %1 = arith.cmpi eq, %arg2, %c0_i32_0 : i32
    %2 = arith.andi %0, %1 : i1
    %3 = arith.extui %2 : i1 to i32
    %c0_i32_1 = arith.constant 0 : i32
    %4 = arith.cmpi ne, %3, %c0_i32_1 : i32
    scf.if %4 {
      %cst_38 = arith.constant 0.000000e+00 : f32
      %74 = vector.broadcast %cst_38 : f32 to vector<1x1x128xf32>
      %c0_39 = arith.constant 0 : index
      %c0_40 = arith.constant 0 : index
      %c0_41 = arith.constant 0 : index
      %75 = vector.load %arg6[%c0_39, %c0_40, %c0_41] : memref<1x1x128xf32, #tpu.memory_space<vmem>>, vector<1x1x128xf32>
      tpu.vector_store %arg6[%c0_39, %c0_40, %c0_41], %74 {strides = array<i32>} : memref<1x1x128xf32, #tpu.memory_space<vmem>>, vector<1x1x128xf32>,
      %cst_42 = arith.constant -1.000000e+30 : f32
      %76 = vector.broadcast %cst_42 : f32 to vector<1x1x512xf32>
      %c0_43 = arith.constant 0 : index
      %c0_44 = arith.constant 0 : index
      %c0_45 = arith.constant 0 : index
      %77 = vector.load %arg7[%c0_43, %c0_44, %c0_45] : memref<1x1x512xf32, #tpu.memory_space<vmem>>, vector<1x1x512xf32>
      tpu.vector_store %arg7[%c0_43, %c0_44, %c0_45], %76 {strides = array<i32>} : memref<1x1x512xf32, #tpu.memory_space<vmem>>, vector<1x1x512xf32>,
      %cst_46 = arith.constant 0.000000e+00 : f32
      %78 = vector.broadcast %cst_46 : f32 to vector<1x1x512xf32>
      %c0_47 = arith.constant 0 : index
      %c0_48 = arith.constant 0 : index
      %c0_49 = arith.constant 0 : index
      %79 = vector.load %arg8[%c0_47, %c0_48, %c0_49] : memref<1x1x512xf32, #tpu.memory_space<vmem>>, vector<1x1x512xf32>
      tpu.vector_store %arg8[%c0_47, %c0_48, %c0_49], %78 {strides = array<i32>} : memref<1x1x512xf32, #tpu.memory_space<vmem>>, vector<1x1x512xf32>,
    } else {
    }
    %c0_i32_2 = arith.constant 0 : i32
    %5 = arith.cmpi eq, %arg2, %c0_i32_2 : i32
    %6 = arith.extui %5 : i1 to i32
    %c0_i32_3 = arith.constant 0 : i32
    %7 = arith.cmpi ne, %6, %c0_i32_3 : i32
    scf.if %7 {
      %cst_38 = arith.constant -1.000000e+30 : f32
      %74 = vector.broadcast %cst_38 : f32 to vector<256x1xf32>
      %c0_39 = arith.constant 0 : index
      %c0_40 = arith.constant 0 : index
      %75 = vector.load %arg9[%c0_39, %c0_40] : memref<256x1xf32, #tpu.memory_space<vmem>>, vector<256x1xf32>
      tpu.vector_store %arg9[%c0_39, %c0_40], %74 {strides = array<i32>} : memref<256x1xf32, #tpu.memory_space<vmem>>, vector<256x1xf32>,
      %cst_41 = arith.constant 0.000000e+00 : f32
      %76 = vector.broadcast %cst_41 : f32 to vector<256x1xf32>
      %c0_42 = arith.constant 0 : index
      %c0_43 = arith.constant 0 : index
      %77 = vector.load %arg10[%c0_42, %c0_43] : memref<256x1xf32, #tpu.memory_space<vmem>>, vector<256x1xf32>
      tpu.vector_store %arg10[%c0_42, %c0_43], %76 {strides = array<i32>} : memref<256x1xf32, #tpu.memory_space<vmem>>, vector<256x1xf32>,
      %c0_44 = arith.constant 0 : index
      %c0_45 = arith.constant 0 : index
      %78 = memref.load %arg3[%c0_44, %c0_45] : memref<1x1xf32, #tpu.memory_space<smem>>
      %c0_46 = arith.constant 0 : index
      %c0_47 = arith.constant 0 : index
      %79 = vector.load %arg4[%c0_46, %c0_47] : memref<256x128xf32, #tpu.memory_space<vmem>>, vector<256x128xf32>
      %80 = vector.broadcast %78 : f32 to vector<256x128xf32>
      %81 = arith.mulf %79, %80 : vector<256x128xf32>
      %c0_48 = arith.constant 0 : index
      %c0_49 = arith.constant 0 : index
      %82 = vector.load %arg11[%c0_48, %c0_49] : memref<256x128xf32, #tpu.memory_space<vmem>>, vector<256x128xf32>
      tpu.vector_store %arg11[%c0_48, %c0_49], %81 {strides = array<i32>} : memref<256x128xf32, #tpu.memory_space<vmem>>, vector<256x128xf32>,
    } else {
    }
    %c256_i32 = arith.constant 256 : i32
    %8 = arith.muli %arg2, %c256_i32 : i32
    %9 = tpu.assume_multiple %8, 256 : i32
    %10 = arith.index_cast %9 : i32 to index
    %c0 = arith.constant 0 : index
    %11 = vector.load %arg5[%10, %c0] : memref<512x128xf32, #tpu.memory_space<vmem>>, vector<256x128xf32>
    %c0_4 = arith.constant 0 : index
    %c0_5 = arith.constant 0 : index
    %12 = vector.load %arg11[%c0_4, %c0_5] : memref<256x128xf32, #tpu.memory_space<vmem>>, vector<256x128xf32>
    %cst = arith.constant dense<0.000000e+00> : vector<256x256xf32>
    %13 = tpu.matmul %12, %11, %cst {dimension_numbers = #tpu.dot_dimension_numbers<[1], [1], [0], [0], [0, 0, 1, 0], [], []>} : vector<256x128xf32>, vector<256x128xf32>, vector<256x256xf32> -> vector<256x256xf32>
    %cst_6 = arith.constant dense<0xFF800000> : vector<256xf32>
    %14 = vector.multi_reduction <maximumf>, %13, %cst_6 [1] : vector<256x256xf32> to vector<256xf32>
    %15 = vector.shape_cast %14 : vector<256xf32> to vector<256x1xf32>
    %cst_7 = arith.constant dense<0xFF800000> : vector<256xf32>
    %16 = vector.multi_reduction <maximumf>, %13, %cst_7 [0] : vector<256x256xf32> to vector<256xf32>
    %17 = vector.shape_cast %16 : vector<256xf32> to vector<1x256xf32>
    %18 = vector.shape_cast %15 : vector<256x1xf32> to vector<1x256x1xf32>
    %cst_8 = arith.constant dense<0xFF800000> : vector<1xf32>
    %19 = vector.multi_reduction <maximumf>, %18, %cst_8 [1, 2] : vector<1x256x1xf32> to vector<1xf32>
    %20 = vector.shape_cast %19 : vector<1xf32> to vector<1x1x1xf32>
    %21 = vector.extract %20[0, 0, 0] : f32 from vector<1x1x1xf32>
    %22 = vector.broadcast %21 : f32 to vector<256x256xf32>
    %23 = arith.subf %13, %22 : vector<256x256xf32>
    %24 = math.exp %23 : vector<256x256xf32>
    %cst_9 = arith.constant dense<0.000000e+00> : vector<256xf32>
    %25 = vector.multi_reduction <add>, %24, %cst_9 [1] : vector<256x256xf32> to vector<256xf32>
    %26 = vector.shape_cast %25 : vector<256xf32> to vector<256x1xf32>
    %cst_10 = arith.constant dense<0.000000e+00> : vector<256xf32>
    %27 = vector.multi_reduction <add>, %24, %cst_10 [0] : vector<256x256xf32> to vector<256xf32>
    %28 = vector.shape_cast %27 : vector<256xf32> to vector<1x256xf32>
    %c0_11 = arith.constant 0 : index
    %c0_12 = arith.constant 0 : index
    %29 = vector.load %arg9[%c0_11, %c0_12] : memref<256x1xf32, #tpu.memory_space<vmem>>, vector<256x1xf32>
    %30 = arith.maximumf %29, %15 : vector<256x1xf32>
    %31 = vector.broadcast %21 : f32 to vector<256x1xf32>
    %32 = arith.subf %31, %30 : vector<256x1xf32>
    %cst_13 = arith.constant 8.000000e+01 : f32
    %33 = vector.broadcast %cst_13 : f32 to vector<256x1xf32>
    %34 = arith.minimumf %32, %33 : vector<256x1xf32>
    %35 = math.exp %34 : vector<256x1xf32>
    %c0_14 = arith.constant 0 : index
    %c0_15 = arith.constant 0 : index
    %36 = vector.load %arg10[%c0_14, %c0_15] : memref<256x1xf32, #tpu.memory_space<vmem>>, vector<256x1xf32>
    %37 = arith.subf %29, %30 : vector<256x1xf32>
    %38 = math.exp %37 : vector<256x1xf32>
    %39 = arith.mulf %36, %38 : vector<256x1xf32>
    %40 = arith.mulf %26, %35 : vector<256x1xf32>
    %41 = arith.addf %39, %40 : vector<256x1xf32>
    %c0_16 = arith.constant 0 : index
    %c0_17 = arith.constant 0 : index
    %42 = vector.load %arg10[%c0_16, %c0_17] : memref<256x1xf32, #tpu.memory_space<vmem>>, vector<256x1xf32>
    tpu.vector_store %arg10[%c0_16, %c0_17], %41 {strides = array<i32>} : memref<256x1xf32, #tpu.memory_space<vmem>>, vector<256x1xf32>,
    %c0_18 = arith.constant 0 : index
    %c0_19 = arith.constant 0 : index
    %43 = vector.load %arg9[%c0_18, %c0_19] : memref<256x1xf32, #tpu.memory_space<vmem>>, vector<256x1xf32>
    tpu.vector_store %arg9[%c0_18, %c0_19], %30 {strides = array<i32>} : memref<256x1xf32, #tpu.memory_space<vmem>>, vector<256x1xf32>,
    %c0_i32_20 = arith.constant 0 : i32
    %c0_i32_21 = arith.constant 0 : i32
    %c0_i32_22 = arith.constant 0 : i32
    %44 = tpu.memref_slice %arg7[%c0_i32_20, %c0_i32_21, %c0_i32_22] : memref<1x1x512xf32, #tpu.memory_space<vmem>> -> memref<1x1x512xf32, #tpu.memory_space<vmem>>
    %45 = tpu.memref_squeeze %44 : memref<1x1x512xf32, #tpu.memory_space<vmem>> -> memref<1x512xf32, #tpu.memory_space<vmem>>
    %c0_23 = arith.constant 0 : index
    %46 = arith.index_cast %9 : i32 to index
    %47 = vector.load %45[%c0_23, %46] : memref<1x512xf32, #tpu.memory_space<vmem>>, vector<1x256xf32>
    %c0_i32_24 = arith.constant 0 : i32
    %c0_i32_25 = arith.constant 0 : i32
    %c0_i32_26 = arith.constant 0 : i32
    %48 = tpu.memref_slice %arg8[%c0_i32_24, %c0_i32_25, %c0_i32_26] : memref<1x1x512xf32, #tpu.memory_space<vmem>> -> memref<1x1x512xf32, #tpu.memory_space<vmem>>
    %49 = tpu.memref_squeeze %48 : memref<1x1x512xf32, #tpu.memory_space<vmem>> -> memref<1x512xf32, #tpu.memory_space<vmem>>
    %c0_27 = arith.constant 0 : index
    %50 = arith.index_cast %9 : i32 to index
    %51 = vector.load %49[%c0_27, %50] : memref<1x512xf32, #tpu.memory_space<vmem>>, vector<1x256xf32>
    %52 = arith.maximumf %47, %17 : vector<1x256xf32>
    %53 = vector.broadcast %21 : f32 to vector<1x256xf32>
    %54 = arith.subf %53, %52 : vector<1x256xf32>
    %cst_28 = arith.constant 8.000000e+01 : f32
    %55 = vector.broadcast %cst_28 : f32 to vector<1x256xf32>
    %56 = arith.minimumf %54, %55 : vector<1x256xf32>
    %57 = math.exp %56 : vector<1x256xf32>
    %58 = arith.subf %47, %52 : vector<1x256xf32>
    %59 = math.exp %58 : vector<1x256xf32>
    %60 = arith.mulf %51, %59 : vector<1x256xf32>
    %61 = arith.mulf %28, %57 : vector<1x256xf32>
    %62 = arith.addf %60, %61 : vector<1x256xf32>
    %c0_i32_29 = arith.constant 0 : i32
    %c0_i32_30 = arith.constant 0 : i32
    %c0_i32_31 = arith.constant 0 : i32
    %63 = tpu.memref_slice %arg8[%c0_i32_29, %c0_i32_30, %c0_i32_31] : memref<1x1x512xf32, #tpu.memory_space<vmem>> -> memref<1x1x512xf32, #tpu.memory_space<vmem>>
    %64 = tpu.memref_squeeze %63 : memref<1x1x512xf32, #tpu.memory_space<vmem>> -> memref<1x512xf32, #tpu.memory_space<vmem>>
    %c0_32 = arith.constant 0 : index
    %65 = arith.index_cast %9 : i32 to index
    %66 = vector.load %64[%c0_32, %65] : memref<1x512xf32, #tpu.memory_space<vmem>>, vector<1x256xf32>
    tpu.vector_store %64[%c0_32, %65], %62 {strides = array<i32>} : memref<1x512xf32, #tpu.memory_space<vmem>>, vector<1x256xf32>,
    %c0_i32_33 = arith.constant 0 : i32
    %c0_i32_34 = arith.constant 0 : i32
    %c0_i32_35 = arith.constant 0 : i32
    %67 = tpu.memref_slice %arg7[%c0_i32_33, %c0_i32_34, %c0_i32_35] : memref<1x1x512xf32, #tpu.memory_space<vmem>> -> memref<1x1x512xf32, #tpu.memory_space<vmem>>
    %68 = tpu.memref_squeeze %67 : memref<1x1x512xf32, #tpu.memory_space<vmem>> -> memref<1x512xf32, #tpu.memory_space<vmem>>
    %c0_36 = arith.constant 0 : index
    %69 = arith.index_cast %9 : i32 to index
    %70 = vector.load %68[%c0_36, %69] : memref<1x512xf32, #tpu.memory_space<vmem>>, vector<1x256xf32>
    tpu.vector_store %68[%c0_36, %69], %52 {strides = array<i32>} : memref<1x512xf32, #tpu.memory_space<vmem>>, vector<1x256xf32>,
    %c1_i32 = arith.constant 1 : i32
    %71 = arith.cmpi eq, %arg2, %c1_i32 : i32
    %72 = arith.extui %71 : i1 to i32
    %c0_i32_37 = arith.constant 0 : i32
    %73 = arith.cmpi ne, %72, %c0_i32_37 : i32
    scf.if %73 {
      %c0_38 = arith.constant 0 : index
      %c0_39 = arith.constant 0 : index
      %74 = vector.load %arg9[%c0_38, %c0_39] : memref<256x1xf32, #tpu.memory_space<vmem>>, vector<256x1xf32>
      %c0_40 = arith.constant 0 : index
      %c0_41 = arith.constant 0 : index
      %75 = vector.load %arg10[%c0_40, %c0_41] : memref<256x1xf32, #tpu.memory_space<vmem>>, vector<256x1xf32>
      %76 = math.log %75 : vector<256x1xf32>
      %77 = arith.addf %74, %76 : vector<256x1xf32>
      %c0_42 = arith.constant 0 : index
      %c0_43 = arith.constant 0 : index
      %c0_44 = arith.constant 0 : index
      %78 = vector.load %arg6[%c0_42, %c0_43, %c0_44] : memref<1x1x128xf32, #tpu.memory_space<vmem>>, vector<1x1x128xf32>
      %79 = vector.shape_cast %77 : vector<256x1xf32> to vector<1x256x1xf32>
      %cst_45 = arith.constant dense<0.000000e+00> : vector<1xf32>
      %80 = vector.multi_reduction <add>, %79, %cst_45 [1, 2] : vector<1x256x1xf32> to vector<1xf32>
      %81 = vector.shape_cast %80 : vector<1xf32> to vector<1x1x1xf32>
      %82 = vector.extract %81[0, 0, 0] : f32 from vector<1x1x1xf32>
      %83 = vector.broadcast %82 : f32 to vector<1x1x128xf32>
      %84 = arith.addf %78, %83 : vector<1x1x128xf32>
      %c0_46 = arith.constant 0 : index
      %c0_47 = arith.constant 0 : index
      %c0_48 = arith.constant 0 : index
      %85 = vector.load %arg6[%c0_46, %c0_47, %c0_48] : memref<1x1x128xf32, #tpu.memory_space<vmem>>, vector<1x1x128xf32>
      tpu.vector_store %arg6[%c0_46, %c0_47, %c0_48], %84 {strides = array<i32>} : memref<1x1x128xf32, #tpu.memory_space<vmem>>, vector<1x1x128xf32>,
    } else {
    }
    return
  }
  func.func @transform_0(%arg0: i32, %arg1: i32, %arg2: i32) -> (i32, i32) {
    %c0_i32 = arith.constant 0 : i32
    %c0_i32_0 = arith.constant 0 : i32
    %c0_i32_1 = arith.constant 0 : i32
    return %c0_i32, %c0_i32_0 : i32, i32
  }
  func.func @transform_1(%arg0: i32, %arg1: i32, %arg2: i32) -> (i32, i32) {
    %c1_i32 = arith.constant 1 : i32
    %0 = arith.muli %arg0, %c1_i32 : i32
    %1 = arith.addi %0, %arg1 : i32
    %c0_i32 = arith.constant 0 : i32
    %c0_i32_0 = arith.constant 0 : i32
    return %1, %c0_i32 : i32, i32
  }
  func.func @transform_2(%arg0: i32, %arg1: i32, %arg2: i32) -> (i32, i32) {
    %c0_i32 = arith.constant 0 : i32
    %c0_i32_0 = arith.constant 0 : i32
    %c0_i32_1 = arith.constant 0 : i32
    return %c0_i32, %c0_i32_0 : i32, i32
  }
  func.func @transform_3(%arg0: i32, %arg1: i32, %arg2: i32) -> (i32, i32, i32) {
    %c0_i32 = arith.constant 0 : i32
    %c0_i32_0 = arith.constant 0 : i32
    %c0_i32_1 = arith.constant 0 : i32
    return %arg0, %c0_i32, %c0_i32_0 : i32, i32, i32
  }
  func.func @transform_4(%arg0: i32, %arg1: i32, %arg2: i32) -> (i32, i32, i32) {
    %c0_i32 = arith.constant 0 : i32
    %c0_i32_0 = arith.constant 0 : i32
    %c0_i32_1 = arith.constant 0 : i32
    return %arg0, %c0_i32, %c0_i32_0 : i32, i32, i32
  }
  func.func @transform_5(%arg0: i32, %arg1: i32, %arg2: i32) -> (i32, i32, i32) {
    %c0_i32 = arith.constant 0 : i32
    %c0_i32_0 = arith.constant 0 : i32
    %c0_i32_1 = arith.constant 0 : i32
    return %arg0, %c0_i32, %c0_i32_0 : i32, i32, i32
  }
}

</mosaic_0001>

<llo_original>
// kernel: tpu_custom_call.1
$region0: #{tpu_custom_call.1}
  #allocation0 [shape = 'u32[]', space=smem, size = 0x4, offset = 0x4, fixed_abs, tag = 'smem constant byte address 0x4 - core index']
  #allocation1 [shape = 'u32[72,128]{1,0:T(1,128)}', space=vmem, size = 0x9000, scoped, tag = 'internal scratch']
  #allocation2 [shape = 'f32[256,1]{1,0:T(8,128)}', space=vmem, size = 0x20000, scoped, tag = 'scratch operand']
  #allocation3 [shape = 'f32[256,1]{1,0:T(8,128)}', space=vmem, size = 0x20000, scoped, tag = 'scratch operand']
  #allocation4 [shape = 'f32[256,128]{1,0:T(8,128)}', space=vmem, size = 0x20000, scoped, tag = 'scratch operand']
  #allocation5 [shape = 'f32[1,1]{1,0:T(1,128)S(6)}', space=smem, size = 0x200, scoped, tag = 'scoped memory for tpu_custom_call.1']
  %s0 = inlined_call_operand.<no memory space> [shape: f32[1,1], index: 0, kind: input, shape index: {}]
  %s1 = inlined_call_operand.hbm [shape: f32[512,128], index: 1, kind: input, shape index: {}]
  %s2 = inlined_call_operand.hbm [shape: f32[512,128], index: 2, kind: input, shape index: {}]
  %s3 = inlined_call_operand.hbm [shape: f32[2,1,128], index: 3, kind: output, shape index: {0}]
  %s4 = inlined_call_operand.hbm [shape: f32[2,1,512], index: 4, kind: output, shape index: {1}]
  %s5 = inlined_call_operand.hbm [shape: f32[2,1,512], index: 5, kind: output, shape index: {2}]
  %6 = xla_tuple %s3, %s4, %s5
  %s7 = sld [smem:[#allocation0]]
  $region81: #{tpu_custom_call.1} parent=0
    _
  %s9 = ssub.s32 1, %s7
  %s10 = scalar_select 0, %s9, %s7
  %11 = sst [smem:[#allocation5]] %s0
  $region1: #{tpu_custom_call.1} parent=0
    #allocation6 [shape = 'u8[262144]{0}', space=vmem, size = 0x40000, scoped, tag = 'input window, operand 1']
    #allocation7 [shape = 's32[2]{0}', space=sflag, size = 0x8, scoped, tag = 'scoped memory for tpu_custom_call.1']
    #allocation8 [shape = 's32[2]{0}', space=sflag, size = 0x8, scoped, tag = 'scoped memory for tpu_custom_call.1']
    #allocation9 [shape = 'u8[262144]{0}', space=vmem, size = 0x40000, scoped, tag = 'input window, operand 2, single buffered']
    #allocation10 [shape = 's32[1]{0}', space=sflag, size = 0x4, scoped, tag = 'scoped memory for tpu_custom_call.1']
    #allocation11 [shape = 'u8[1024]{0}', space=vmem, size = 0x400, scoped, tag = 'output window, operand 0']
    #allocation12 [shape = 'u8[4096]{0}', space=vmem, size = 0x1000, scoped, tag = 'output window, operand 1']
    #allocation13 [shape = 's32[2]{0}', space=sflag, size = 0x8, scoped, tag = 'scoped memory for tpu_custom_call.1']
    #allocation14 [shape = 'u8[4096]{0}', space=vmem, size = 0x1000, scoped, tag = 'output window, operand 2']
    %12 = vsyncpa [#allocation7], 0
    %s13 = scalar_lea.sflag [#allocation7], 1
    %14 = vsyncpa %s13, 0
    %15 = vsyncpa [#allocation10], 0
    %16 = vsyncpa [#allocation8], 0
    %s17 = scalar_lea.sflag [#allocation8], 1
    %18 = vsyncpa %s17, 0
    %19 = vsyncpa [#allocation13], 0
    %s20 = scalar_lea.sflag [#allocation13], 1
    %21 = vsyncpa %s20, 0
    loop: start=0, step=1, limit=6
    $region2: #{tpu_custom_call.1} parent=1 // loop_pre_header
      _
    $region3: #{tpu_custom_call.1} parent=1 // loop_header
      %s23 = sphi 0, %s27
      %p24 = scmp.ge.s32.totalorder %s23, 6
      %s30 = sphi 0, %s49
      %s31 = sphi 0, %s45
      %s32 = sphi 0, %s41
      %s33 = sphi 0, %s30
      %s34 = sphi 0, %s31
      %s35 = sphi 0, %s32
      %s36 = sphi 0, %s33
      %s37 = sphi 0, %s34
      %s38 = sphi 0, %s35
      %s50 = sphi 0, %s50
      %s52 = sphi 0, %s50
      %s53 = sphi 0, %s52
      %s67 = sphi 0, %s53
      %s75 = sphi 0, %s77
      %s78 = sphi 0, %s75
      %s79 = sphi 0, %s78
      %s95 = sphi 0, %s79
      %s99 = sphi 0, %s99
      %s101 = sphi 0, %s99
      %s102 = sphi 0, %s101
      %s116 = sphi 0, %s102
      %s122 = sphi 0, %s124
      %s125 = sphi 0, %s122
      %s126 = sphi 0, %s125
      %s142 = sphi 0, %s126
      %s148 = sphi 0, %s150
      %s151 = sphi 0, %s148
      %s152 = sphi 0, %s151
      %s168 = sphi 0, %s152
      %s174 = sphi 0, %s176
      %s177 = sphi 0, %s174
      %s178 = sphi 0, %s177
      %s194 = sphi 0, %s178
    $region4: #{tpu_custom_call.1} parent=1 // loop_header_branch
      %26 = sbr.rel (%p24) target = $region8
    $region5: #{tpu_custom_call.1} parent=1 // loop_body
      %s28 = ssub.s32 %s23, 1
      %s29 = ssub.s32 %s23, 2
      %s39 = sadd.s32 1, %s32
      %p40 = scmp.ge.s32.totalorder %s39, 2
      %s41 = scalar_select %p40, 0, %s39
      %s42 = sadd.s32 1, %s31
      %s43 = scalar_select %p40, %s42, %s31
      %p44 = scmp.ge.s32.totalorder %s43, 1
      %s45 = scalar_select %p44, 0, %s43
      %s46 = sadd.s32 1, %s30
      %s47 = scalar_select %p44, %s46, %s30
      %p48 = scmp.ge.s32.totalorder %s47, 2
      %s49 = scalar_select %p48, 0, %s47
      %s51 = sadd.s32 %s50, 1
      %p54 = scmp.eq.s32.totalorder %s23, 3
      %p55 = scmp.ne.s32.totalorder %s50, %s52
      %p56 = scmp.eq.s32.totalorder %s23, 0
      %p57 = por %p55, %p56
      %p58 = scmp.ne.s32.totalorder %s50, %s52
      %p59 = scmp.eq.s32.totalorder %s28, 3
      %p60 = por %p58, %p59
      %p61 = scmp.ne.s32.totalorder %s52, %s53
      %p62 = scmp.eq.s32.totalorder %s28, 0
      %p63 = por %p61, %p62
      %p64 = scmp.ne.s32.totalorder %s52, %s53
      %p65 = scmp.eq.s32.totalorder %s29, 3
      %p66 = por %p64, %p65
      %p68 = scmp.ne.s32.totalorder %s53, %s67
      %p69 = scmp.eq.s32.totalorder %s29, 0
      %p70 = por %p68, %p69
      %s71 = sadd.s32 %s30, %s31
      %s72 = sadd.s32 %s49, %s45
      %s73 = ssub.s32 %s71, %s72
      %p74 = scmp.eq.s32.totalorder %s73, 0
      %s76 = sadd.s32 %s75, 1
      %s77 = scalar_select %p74, %s75, %s76
      %p80 = pneg %p74
      %p81 = scmp.eq.s32.totalorder %s23, 3
      %p82 = por %p80, %p81
      %p83 = scmp.ne.s32.totalorder %s75, %s78
      %p84 = scmp.eq.s32.totalorder %s23, 0
      %p85 = por %p83, %p84
      %p86 = scmp.ne.s32.totalorder %s75, %s78
      %p87 = scmp.eq.s32.totalorder %s28, 3
      %p88 = por %p86, %p87
      %p89 = scmp.ne.s32.totalorder %s78, %s79
      %p90 = scmp.eq.s32.totalorder %s28, 0
      %p91 = por %p89, %p90
      %p92 = scmp.ne.s32.totalorder %s78, %s79
      %p93 = scmp.eq.s32.totalorder %s29, 3
      %p94 = por %p92, %p93
      %p96 = scmp.ne.s32.totalorder %s79, %s95
      %p97 = scmp.eq.s32.totalorder %s29, 0
      %p98 = por %p96, %p97
      %s100 = sadd.s32 %s99, 1
      %p103 = scmp.eq.s32.totalorder %s23, 3
      %p104 = scmp.ne.s32.totalorder %s99, %s101
      %p105 = scmp.eq.s32.totalorder %s23, 0
      %p106 = por %p104, %p105
      %p107 = scmp.ne.s32.totalorder %s99, %s101
      %p108 = scmp.eq.s32.totalorder %s28, 3
      %p109 = por %p107, %p108
      %p110 = scmp.ne.s32.totalorder %s101, %s102
      %p111 = scmp.eq.s32.totalorder %s28, 0
      %p112 = por %p110, %p111
      %p113 = scmp.ne.s32.totalorder %s101, %s102
      %p114 = scmp.eq.s32.totalorder %s29, 3
      %p115 = por %p113, %p114
      %p117 = scmp.ne.s32.totalorder %s102, %s116
      %p118 = scmp.eq.s32.totalorder %s29, 0
      %p119 = por %p117, %p118
      %s120 = ssub.s32 %s30, %s49
      %p121 = scmp.eq.s32.totalorder %s120, 0
      %s123 = sadd.s32 %s122, 1
      %s124 = scalar_select %p121, %s122, %s123
      %p127 = pneg %p121
      %p128 = scmp.eq.s32.totalorder %s23, 3
      %p129 = por %p127, %p128
      %p130 = scmp.ne.s32.totalorder %s122, %s125
      %p131 = scmp.eq.s32.totalorder %s23, 0
      %p132 = por %p130, %p131
      %p133 = scmp.ne.s32.totalorder %s122, %s125
      %p134 = scmp.eq.s32.totalorder %s28, 3
      %p135 = por %p133, %p134
      %p136 = scmp.ne.s32.totalorder %s125, %s126
      %p137 = scmp.eq.s32.totalorder %s28, 0
      %p138 = por %p136, %p137
      %p139 = scmp.ne.s32.totalorder %s125, %s126
      %p140 = scmp.eq.s32.totalorder %s29, 3
      %p141 = por %p139, %p140
      %p143 = scmp.ne.s32.totalorder %s126, %s142
      %p144 = scmp.eq.s32.totalorder %s29, 0
      %p145 = por %p143, %p144
      %s146 = ssub.s32 %s30, %s49
      %p147 = scmp.eq.s32.totalorder %s146, 0
      %s149 = sadd.s32 %s148, 1
      %s150 = scalar_select %p147, %s148, %s149
      %p153 = pneg %p147
      %p154 = scmp.eq.s32.totalorder %s23, 3
      %p155 = por %p153, %p154
      %p156 = scmp.ne.s32.totalorder %s148, %s151
      %p157 = scmp.eq.s32.totalorder %s23, 0
      %p158 = por %p156, %p157
      %p159 = scmp.ne.s32.totalorder %s148, %s151
      %p160 = scmp.eq.s32.totalorder %s28, 3
      %p161 = por %p159, %p160
      %p162 = scmp.ne.s32.totalorder %s151, %s152
      %p163 = scmp.eq.s32.totalorder %s28, 0
      %p164 = por %p162, %p163
      %p165 = scmp.ne.s32.totalorder %s151, %s152
      %p166 = scmp.eq.s32.totalorder %s29, 3
      %p167 = por %p165, %p166
      %p169 = scmp.ne.s32.totalorder %s152, %s168
      %p170 = scmp.eq.s32.totalorder %s29, 0
      %p171 = por %p169, %p170
      %s172 = ssub.s32 %s30, %s49
      %p173 = scmp.eq.s32.totalorder %s172, 0
      %s175 = sadd.s32 %s174, 1
      %s176 = scalar_select %p173, %s174, %s175
      %p179 = pneg %p173
      %p180 = scmp.eq.s32.totalorder %s23, 3
      %p181 = por %p179, %p180
      %p182 = scmp.ne.s32.totalorder %s174, %s177
      %p183 = scmp.eq.s32.totalorder %s23, 0
      %p184 = por %p182, %p183
      %p185 = scmp.ne.s32.totalorder %s174, %s177
      %p186 = scmp.eq.s32.totalorder %s28, 3
      %p187 = por %p185, %p186
      %p188 = scmp.ne.s32.totalorder %s177, %s178
      %p189 = scmp.eq.s32.totalorder %s28, 0
      %p190 = por %p188, %p189
      %p191 = scmp.ne.s32.totalorder %s177, %s178
      %p192 = scmp.eq.s32.totalorder %s29, 3
      %p193 = por %p191, %p192
      %p195 = scmp.ne.s32.totalorder %s178, %s194
      %p196 = scmp.eq.s32.totalorder %s29, 0
      %p197 = por %p195, %p196
      %p198 = scmp.le.s32.totalorder 1, %s23
      %p199 = scmp.lt.s32.totalorder %s23, 5
      %p200 = pnand %p198, %p199
      %p201 = pneg %p200
      // Predicated region
      $region9: #{tpu_custom_call.1} parent=5 // pred_check
        _
      $region10: #{tpu_custom_call.1} parent=5 // pred_check_branch
        %203 = sbr.rel (%p200) target = $region12
      $region11: #{tpu_custom_call.1} parent=5 // pred_region
        %s204 = ssub.s32 %s23, 1
        // Predicated region
        $region13: #{tpu_custom_call.1} parent=11 // pred_check
          %p205 = pneg %p63
        $region14: #{tpu_custom_call.1} parent=11 // pred_check_branch
          %207 = sbr.rel (%p205) target = $region16
        $region15: #{tpu_custom_call.1} parent=11 // pred_region
          _
        $region16: #{tpu_custom_call.1} parent=11 // pred_fallthru
          _
        // Predicated region
        $region17: #{tpu_custom_call.1} parent=11 // pred_check
          %p208 = pneg %p112
        $region18: #{tpu_custom_call.1} parent=11 // pred_check_branch
          %210 = sbr.rel (%p208) target = $region20
        $region19: #{tpu_custom_call.1} parent=11 // pred_region
          %212 = vsyncadd [#allocation10], 0
          %s213 = sshll.u32 %s2, 4
          %s214 = int_to_ptr.hbm [resolvable:$true] %s213
          %s215 = sshll.u32 [#allocation9], 4
          %s216 = int_to_ptr.vmem [resolvable:$true] %s215
          %221 = dma.hbm_to_vmem [thread:$0]  %s214, 8192, %s216, [#allocation10], 128, 128, 8
        $region20: #{tpu_custom_call.1} parent=11 // pred_fallthru
          _
      $region12: #{tpu_custom_call.1} parent=5 // pred_fallthru
        _
      %p222 = scmp.lt.s32.totalorder %s23, 4
      // Predicated region
      $region21: #{tpu_custom_call.1} parent=5 // pred_check
        %p223 = pneg %p222
      $region22: #{tpu_custom_call.1} parent=5 // pred_check_branch
        %225 = sbr.rel (%p223) target = $region24
      $region23: #{tpu_custom_call.1} parent=5 // pred_region
        // Predicated region
        $region25: #{tpu_custom_call.1} parent=23 // pred_check
          %p226 = pneg %p85
        $region26: #{tpu_custom_call.1} parent=23 // pred_check_branch
          %228 = sbr.rel (%p226) target = $region28
        $region27: #{tpu_custom_call.1} parent=23 // pred_region
          %s229 = sand.u32 %s75, 1
          %s230 = scalar_lea.sflag [#allocation7], %s229
          %s231 = sand.u32 %s75, 1
          %s232 = smul.addr %s231, 256
          %s233 = scalar_lea.vmem [#allocation6], %s232
          %s234 = sadd.s32 %s30, %s31
          %s235 = smul.u32 32, %s234
          %237 = vsyncadd %s230, 0
          %s238 = smul.addr %s235, 8
          %s239 = scalar_lea.hbm %s1, %s238
          %s240 = sshll.u32 %s239, 4
          %s241 = int_to_ptr.hbm [resolvable:$true] %s240
          %s242 = sshll.u32 %s233, 4
          %s243 = int_to_ptr.vmem [resolvable:$true] %s242
          %248 = dma.hbm_to_vmem [thread:$0]  %s241, 4096, %s243, %s230, 128, 128, 8
        $region28: #{tpu_custom_call.1} parent=23 // pred_fallthru
          _
      $region24: #{tpu_custom_call.1} parent=5 // pred_fallthru
        _
      %p249 = scmp.le.s32.totalorder 1, %s23
      %p250 = scmp.lt.s32.totalorder %s23, 5
      %p251 = pnand %p249, %p250
      %p252 = pneg %p251
      // Predicated region
      $region29: #{tpu_custom_call.1} parent=5 // pred_check
        _
      $region30: #{tpu_custom_call.1} parent=5 // pred_check_branch
        %254 = sbr.rel (%p251) target = $region32
      $region31: #{tpu_custom_call.1} parent=5 // pred_region
        %s255 = ssub.s32 %s23, 1
        %s256 = sand.u32 %s78, 1
        %s257 = scalar_lea.sflag [#allocation7], %s256
        %s258 = sand.u32 %s78, 1
        %s259 = smul.addr %s258, 256
        %s260 = scalar_lea.vmem [#allocation6], %s259
        // Predicated region
        $region33: #{tpu_custom_call.1} parent=31 // pred_check
          %p261 = pneg %p91
        $region34: #{tpu_custom_call.1} parent=31 // pred_check_branch
          %263 = sbr.rel (%p261) target = $region36
        $region35: #{tpu_custom_call.1} parent=31 // pred_region
          %265 = dma.done %s257, 4096
        $region36: #{tpu_custom_call.1} parent=31 // pred_fallthru
          _
        // Predicated region
        $region37: #{tpu_custom_call.1} parent=31 // pred_check
          %p266 = pneg %p112
        $region38: #{tpu_custom_call.1} parent=31 // pred_check_branch
          %268 = sbr.rel (%p266) target = $region40
        $region39: #{tpu_custom_call.1} parent=31 // pred_region
          %270 = dma.done [#allocation10], 8192
        $region40: #{tpu_custom_call.1} parent=31 // pred_fallthru
          _
        %p271 = pneg %p63
        %p272 = pneg %p60
        %s273 = sand.u32 %s78, 1
        %s274 = scalar_lea.sflag [#allocation7], %s273
        %s275 = sand.u32 %s78, 1
        %s276 = smul.addr %s275, 256
        %s277 = scalar_lea.vmem [#allocation6], %s276
        %p278 = pneg %p91
        %p279 = pneg %p88
        %p280 = pneg %p112
        %p281 = pneg %p109
        %p282 = pneg %p138
        %p283 = pneg %p135
        %s284 = sand.u32 %s125, 1
        %s285 = scalar_lea.sflag [#allocation8], %s284
        %s286 = sand.u32 %s125, 1
        %s287 = scalar_lea.vmem [#allocation11], %s286
        %p288 = pneg %p164
        %p289 = pneg %p161
        %s290 = sand.u32 %s28, 1
        %s291 = scalar_lea.sflag [#allocation13], %s290
        %s292 = sand.u32 %s151, 1
        %s293 = smul.addr %s292, 4
        %s294 = scalar_lea.vmem [#allocation12], %s293
        %p295 = pneg %p190
        %p296 = pneg %p187
        %s297 = sand.u32 %s28, 1
        %s298 = scalar_lea.sflag [#allocation13], %s297
        %s299 = sand.u32 %s177, 1
        %s300 = smul.addr %s299, 4
        %s301 = scalar_lea.vmem [#allocation14], %s300
        %s302 = sadd.s32 %s33, %s34
        %s303 = smul.u32 32, %s302
        %p304 = scmp.eq.s32.totalorder %s34, 0
        %p305 = scmp.eq.s32.totalorder %s35, 0
        %p306 = pnand %p304, %p305
        %p307 = pneg %p306
        // Predicated region
        $region41: #{tpu_custom_call.1} parent=31 // pred_check
          _
        $region42: #{tpu_custom_call.1} parent=31 // pred_check_branch
          %309 = sbr.rel (%p306) target = $region44
        $region43: #{tpu_custom_call.1} parent=31 // pred_region
          %310 = vst [vmem:[%s287] sm:$0x1] 0.0
          %v311 = vlaneseq
          %vm312 = vcmp.ge.s32.totalorder %v311, 0
          %vm313 = vcmp.lt.s32.totalorder %v311, 512
          %vm314 = vmand %vm312, %vm313
          %315 = vst.msk [vmem:[%s294] sm:$0xf] %vm314, -1e+30
          %316 = vst.msk [vmem:[%s301] sm:$0xf] %vm314, 0.0
        $region44: #{tpu_custom_call.1} parent=31 // pred_fallthru
          _
        // Predicated region
        $region45: #{tpu_custom_call.1} parent=31 // pred_check
          %p317 = pneg %p305
        $region46: #{tpu_custom_call.1} parent=31 // pred_check_branch
          %319 = sbr.rel (%p317) target = $region48
        $region47: #{tpu_custom_call.1} parent=31 // pred_region
          %vm320 = vcmask 7168
          %321 = vst.msk [vmem:[#allocation2] sm:$0xff] %vm320, -1e+30
          %322 = vst.msk [vmem:[#allocation2 + $0x8] sm:$0xff] %vm320, -1e+30
          %323 = vst.msk [vmem:[#allocation2 + $0x10] sm:$0xff] %vm320, -1e+30
          %324 = vst.msk [vmem:[#allocation2 + $0x18] sm:$0xff] %vm320, -1e+30
          %325 = vst.msk [vmem:[#allocation2 + $0x20] sm:$0xff] %vm320, -1e+30
          %326 = vst.msk [vmem:[#allocation2 + $0x28] sm:$0xff] %vm320, -1e+30
          %327 = vst.msk [vmem:[#allocation2 + $0x30] sm:$0xff] %vm320, -1e+30
          %328 = vst.msk [vmem:[#allocation2 + $0x38] sm:$0xff] %vm320, -1e+30
          %329 = vst.msk [vmem:[#allocation2 + $0x40] sm:$0xff] %vm320, -1e+30
          %330 = vst.msk [vmem:[#allocation2 + $0x48] sm:$0xff] %vm320, -1e+30
          %331 = vst.msk [vmem:[#allocation2 + $0x50] sm:$0xff] %vm320, -1e+30
          %332 = vst.msk [vmem:[#allocation2 + $0x58] sm:$0xff] %vm320, -1e+30
          %333 = vst.msk [vmem:[#allocation2 + $0x60] sm:$0xff] %vm320, -1e+30
          %334 = vst.msk [vmem:[#allocation2 + $0x68] sm:$0xff] %vm320, -1e+30
          %335 = vst.msk [vmem:[#allocation2 + $0x70] sm:$0xff] %vm320, -1e+30
          %336 = vst.msk [vmem:[#allocation2 + $0x78] sm:$0xff] %vm320, -1e+30
          %337 = vst.msk [vmem:[#allocation2 + $0x80] sm:$0xff] %vm320, -1e+30
          %338 = vst.msk [vmem:[#allocation2 + $0x88] sm:$0xff] %vm320, -1e+30
          %339 = vst.msk [vmem:[#allocation2 + $0x90] sm:$0xff] %vm320, -1e+30
          %340 = vst.msk [vmem:[#allocation2 + $0x98] sm:$0xff] %vm320, -1e+30
          %341 = vst.msk [vmem:[#allocation2 + $0xa0] sm:$0xff] %vm320, -1e+30
          %342 = vst.msk [vmem:[#allocation2 + $0xa8] sm:$0xff] %vm320, -1e+30
          %343 = vst.msk [vmem:[#allocation2 + $0xb0] sm:$0xff] %vm320, -1e+30
          %344 = vst.msk [vmem:[#allocation2 + $0xb8] sm:$0xff] %vm320, -1e+30
          %345 = vst.msk [vmem:[#allocation2 + $0xc0] sm:$0xff] %vm320, -1e+30
          %346 = vst.msk [vmem:[#allocation2 + $0xc8] sm:$0xff] %vm320, -1e+30
          %347 = vst.msk [vmem:[#allocation2 + $0xd0] sm:$0xff] %vm320, -1e+30
          %348 = vst.msk [vmem:[#allocation2 + $0xd8] sm:$0xff] %vm320, -1e+30
          %349 = vst.msk [vmem:[#allocation2 + $0xe0] sm:$0xff] %vm320, -1e+30
          %350 = vst.msk [vmem:[#allocation2 + $0xe8] sm:$0xff] %vm320, -1e+30
          %351 = vst.msk [vmem:[#allocation2 + $0xf0] sm:$0xff] %vm320, -1e+30
          %352 = vst.msk [vmem:[#allocation2 + $0xf8] sm:$0xff] %vm320, -1e+30
          %353 = vst.msk [vmem:[#allocation3] sm:$0xff] %vm320, 0.0
          %354 = vst.msk [vmem:[#allocation3 + $0x8] sm:$0xff] %vm320, 0.0
          %355 = vst.msk [vmem:[#allocation3 + $0x10] sm:$0xff] %vm320, 0.0
          %356 = vst.msk [vmem:[#allocation3 + $0x18] sm:$0xff] %vm320, 0.0
          %357 = vst.msk [vmem:[#allocation3 + $0x20] sm:$0xff] %vm320, 0.0
          %358 = vst.msk [vmem:[#allocation3 + $0x28] sm:$0xff] %vm320, 0.0
          %359 = vst.msk [vmem:[#allocation3 + $0x30] sm:$0xff] %vm320, 0.0
          %360 = vst.msk [vmem:[#allocation3 + $0x38] sm:$0xff] %vm320, 0.0
          %361 = vst.msk [vmem:[#allocation3 + $0x40] sm:$0xff] %vm320, 0.0
          %362 = vst.msk [vmem:[#allocation3 + $0x48] sm:$0xff] %vm320, 0.0
          %363 = vst.msk [vmem:[#allocation3 + $0x50] sm:$0xff] %vm320, 0.0
          %364 = vst.msk [vmem:[#allocation3 + $0x58] sm:$0xff] %vm320, 0.0
          %365 = vst.msk [vmem:[#allocation3 + $0x60] sm:$0xff] %vm320, 0.0
          %366 = vst.msk [vmem:[#allocation3 + $0x68] sm:$0xff] %vm320, 0.0
          %367 = vst.msk [vmem:[#allocation3 + $0x70] sm:$0xff] %vm320, 0.0
          %368 = vst.msk [vmem:[#allocation3 + $0x78] sm:$0xff] %vm320, 0.0
          %369 = vst.msk [vmem:[#allocation3 + $0x80] sm:$0xff] %vm320, 0.0
          %370 = vst.msk [vmem:[#allocation3 + $0x88] sm:$0xff] %vm320, 0.0
          %371 = vst.msk [vmem:[#allocation3 + $0x90] sm:$0xff] %vm320, 0.0
          %372 = vst.msk [vmem:[#allocation3 + $0x98] sm:$0xff] %vm320, 0.0
          %373 = vst.msk [vmem:[#allocation3 + $0xa0] sm:$0xff] %vm320, 0.0
          %374 = vst.msk [vmem:[#allocation3 + $0xa8] sm:$0xff] %vm320, 0.0
          %375 = vst.msk [vmem:[#allocation3 + $0xb0] sm:$0xff] %vm320, 0.0
          %376 = vst.msk [vmem:[#allocation3 + $0xb8] sm:$0xff] %vm320, 0.0
          %377 = vst.msk [vmem:[#allocation3 + $0xc0] sm:$0xff] %vm320, 0.0
          %378 = vst.msk [vmem:[#allocation3 + $0xc8] sm:$0xff] %vm320, 0.0
          %379 = vst.msk [vmem:[#allocation3 + $0xd0] sm:$0xff] %vm320, 0.0
          %380 = vst.msk [vmem:[#allocation3 + $0xd8] sm:$0xff] %vm320, 0.0
          %381 = vst.msk [vmem:[#allocation3 + $0xe0] sm:$0xff] %vm320, 0.0
          %382 = vst.msk [vmem:[#allocation3 + $0xe8] sm:$0xff] %vm320, 0.0
          %383 = vst.msk [vmem:[#allocation3 + $0xf0] sm:$0xff] %vm320, 0.0
          %384 = vst.msk [vmem:[#allocation3 + $0xf8] sm:$0xff] %vm320, 0.0
          %s385 = sld [smem:[#allocation5]]
          %v386 = vld [vmem:[%s260] sm:$0xff]
          %v387 = vld [vmem:[%s260 + $0x8] sm:$0xff]
          %v388 = vld [vmem:[%s260 + $0x10] sm:$0xff]
          %v389 = vld [vmem:[%s260 + $0x18] sm:$0xff]
          %v390 = vld [vmem:[%s260 + $0x20] sm:$0xff]
          %v391 = vld [vmem:[%s260 + $0x28] sm:$0xff]
          %v392 = vld [vmem:[%s260 + $0x30] sm:$0xff]
          %v393 = vld [vmem:[%s260 + $0x38] sm:$0xff]
          %v394 = vld [vmem:[%s260 + $0x40] sm:$0xff]
          %v395 = vld [vmem:[%s260 + $0x48] sm:$0xff]
          %v396 = vld [vmem:[%s260 + $0x50] sm:$0xff]
          %v397 = vld [vmem:[%s260 + $0x58] sm:$0xff]
          %v398 = vld [vmem:[%s260 + $0x60] sm:$0xff]
          %v399 = vld [vmem:[%s260 + $0x68] sm:$0xff]
          %v400 = vld [vmem:[%s260 + $0x70] sm:$0xff]
          %v401 = vld [vmem:[%s260 + $0x78] sm:$0xff]
          %v402 = vld [vmem:[%s260 + $0x80] sm:$0xff]
          %v403 = vld [vmem:[%s260 + $0x88] sm:$0xff]
          %v404 = vld [vmem:[%s260 + $0x90] sm:$0xff]
          %v405 = vld [vmem:[%s260 + $0x98] sm:$0xff]
          %v406 = vld [vmem:[%s260 + $0xa0] sm:$0xff]
          %v407 = vld [vmem:[%s260 + $0xa8] sm:$0xff]
          %v408 = vld [vmem:[%s260 + $0xb0] sm:$0xff]
          %v409 = vld [vmem:[%s260 + $0xb8] sm:$0xff]
          %v410 = vld [vmem:[%s260 + $0xc0] sm:$0xff]
          %v411 = vld [vmem:[%s260 + $0xc8] sm:$0xff]
          %v412 = vld [vmem:[%s260 + $0xd0] sm:$0xff]
          %v413 = vld [vmem:[%s260 + $0xd8] sm:$0xff]
          %v414 = vld [vmem:[%s260 + $0xe0] sm:$0xff]
          %v415 = vld [vmem:[%s260 + $0xe8] sm:$0xff]
          %v416 = vld [vmem:[%s260 + $0xf0] sm:$0xff]
          %v417 = vld [vmem:[%s260 + $0xf8] sm:$0xff]
          %v418 = vstv %s385
          %v419 = vmul.f32 %v386, %v418
          %v420 = vmul.f32 %v387, %v418
          %v421 = vmul.f32 %v388, %v418
          %v422 = vmul.f32 %v389, %v418
          %v423 = vmul.f32 %v390, %v418
          %v424 = vmul.f32 %v391, %v418
          %v425 = vmul.f32 %v392, %v418
          %v426 = vmul.f32 %v393, %v418
          %v427 = vmul.f32 %v394, %v418
          %v428 = vmul.f32 %v395, %v418
          %v429 = vmul.f32 %v396, %v418
          %v430 = vmul.f32 %v397, %v418
          %v431 = vmul.f32 %v398, %v418
          %v432 = vmul.f32 %v399, %v418
          %v433 = vmul.f32 %v400, %v418
          %v434 = vmul.f32 %v401, %v418
          %v435 = vmul.f32 %v402, %v418
          %v436 = vmul.f32 %v403, %v418
          %v437 = vmul.f32 %v404, %v418
          %v438 = vmul.f32 %v405, %v418
          %v439 = vmul.f32 %v406, %v418
          %v440 = vmul.f32 %v407, %v418
          %v441 = vmul.f32 %v408, %v418
          %v442 = vmul.f32 %v409, %v418
          %v443 = vmul.f32 %v410, %v418
          %v444 = vmul.f32 %v411, %v418
          %v445 = vmul.f32 %v412, %v418
          %v446 = vmul.f32 %v413, %v418
          %v447 = vmul.f32 %v414, %v418
          %v448 = vmul.f32 %v415, %v418
          %v449 = vmul.f32 %v416, %v418
          %v450 = vmul.f32 %v417, %v418
          %451 = vst [vmem:[#allocation4] sm:$0xff] %v419
          %452 = vst [vmem:[#allocation4 + $0x8] sm:$0xff] %v420
          %453 = vst [vmem:[#allocation4 + $0x10] sm:$0xff] %v421
          %454 = vst [vmem:[#allocation4 + $0x18] sm:$0xff] %v422
          %455 = vst [vmem:[#allocation4 + $0x20] sm:$0xff] %v423
          %456 = vst [vmem:[#allocation4 + $0x28] sm:$0xff] %v424
          %457 = vst [vmem:[#allocation4 + $0x30] sm:$0xff] %v425
          %458 = vst [vmem:[#allocation4 + $0x38] sm:$0xff] %v426
          %459 = vst [vmem:[#allocation4 + $0x40] sm:$0xff] %v427
          %460 = vst [vmem:[#allocation4 + $0x48] sm:$0xff] %v428
          %461 = vst [vmem:[#allocation4 + $0x50] sm:$0xff] %v429
          %462 = vst [vmem:[#allocation4 + $0x58] sm:$0xff] %v430
          %463 = vst [vmem:[#allocation4 + $0x60] sm:$0xff] %v431
          %464 = vst [vmem:[#allocation4 + $0x68] sm:$0xff] %v432
          %465 = vst [vmem:[#allocation4 + $0x70] sm:$0xff] %v433
          %466 = vst [vmem:[#allocation4 + $0x78] sm:$0xff] %v434
          %467 = vst [vmem:[#allocation4 + $0x80] sm:$0xff] %v435
          %468 = vst [vmem:[#allocation4 + $0x88] sm:$0xff] %v436
          %469 = vst [vmem:[#allocation4 + $0x90] sm:$0xff] %v437
          %470 = vst [vmem:[#allocation4 + $0x98] sm:$0xff] %v438
          %471 = vst [vmem:[#allocation4 + $0xa0] sm:$0xff] %v439
          %472 = vst [vmem:[#allocation4 + $0xa8] sm:$0xff] %v440
          %473 = vst [vmem:[#allocation4 + $0xb0] sm:$0xff] %v441
          %474 = vst [vmem:[#allocation4 + $0xb8] sm:$0xff] %v442
          %475 = vst [vmem:[#allocation4 + $0xc0] sm:$0xff] %v443
          %476 = vst [vmem:[#allocation4 + $0xc8] sm:$0xff] %v444
          %477 = vst [vmem:[#allocation4 + $0xd0] sm:$0xff] %v445
          %478 = vst [vmem:[#allocation4 + $0xd8] sm:$0xff] %v446
          %479 = vst [vmem:[#allocation4 + $0xe0] sm:$0xff] %v447
          %480 = vst [vmem:[#allocation4 + $0xe8] sm:$0xff] %v448
          %481 = vst [vmem:[#allocation4 + $0xf0] sm:$0xff] %v449
          %482 = vst [vmem:[#allocation4 + $0xf8] sm:$0xff] %v450
        $region48: #{tpu_custom_call.1} parent=31 // pred_fallthru
          _
        %s483 = smul.u32 %s35, 256
        %s484 = scalar_lea.vmem [#allocation9], %s483
        %v485 = vld [vmem:[%s484] sm:$0xff]
        %v486 = vld [vmem:[%s484 + $0x8] sm:$0xff]
        %v487 = vld [vmem:[%s484 + $0x10] sm:$0xff]
        %v488 = vld [vmem:[%s484 + $0x18] sm:$0xff]
        %v489 = vld [vmem:[%s484 + $0x20] sm:$0xff]
        %v490 = vld [vmem:[%s484 + $0x28] sm:$0xff]
        %v491 = vld [vmem:[%s484 + $0x30] sm:$0xff]
        %v492 = vld [vmem:[%s484 + $0x38] sm:$0xff]
        %v493 = vld [vmem:[%s484 + $0x40] sm:$0xff]
        %v494 = vld [vmem:[%s484 + $0x48] sm:$0xff]
        %v495 = vld [vmem:[%s484 + $0x50] sm:$0xff]
        %v496 = vld [vmem:[%s484 + $0x58] sm:$0xff]
        %v497 = vld [vmem:[%s484 + $0x60] sm:$0xff]
        %v498 = vld [vmem:[%s484 + $0x68] sm:$0xff]
        %v499 = vld [vmem:[%s484 + $0x70] sm:$0xff]
        %v500 = vld [vmem:[%s484 + $0x78] sm:$0xff]
        %v501 = vld [vmem:[%s484 + $0x80] sm:$0xff]
        %v502 = vld [vmem:[%s484 + $0x88] sm:$0xff]
        %v503 = vld [vmem:[%s484 + $0x90] sm:$0xff]
        %v504 = vld [vmem:[%s484 + $0x98] sm:$0xff]
        %v505 = vld [vmem:[%s484 + $0xa0] sm:$0xff]
        %v506 = vld [vmem:[%s484 + $0xa8] sm:$0xff]
        %v507 = vld [vmem:[%s484 + $0xb0] sm:$0xff]
        %v508 = vld [vmem:[%s484 + $0xb8] sm:$0xff]
        %v509 = vld [vmem:[%s484 + $0xc0] sm:$0xff]
        %v510 = vld [vmem:[%s484 + $0xc8] sm:$0xff]
        %v511 = vld [vmem:[%s484 + $0xd0] sm:$0xff]
        %v512 = vld [vmem:[%s484 + $0xd8] sm:$0xff]
        %v513 = vld [vmem:[%s484 + $0xe0] sm:$0xff]
        %v514 = vld [vmem:[%s484 + $0xe8] sm:$0xff]
        %v515 = vld [vmem:[%s484 + $0xf0] sm:$0xff]
        %v516 = vld [vmem:[%s484 + $0xf8] sm:$0xff]
        %v517 = vld [vmem:[#allocation4] sm:$0xff]
        %v518 = vld [vmem:[#allocation4 + $0x8] sm:$0xff]
        %v519 = vld [vmem:[#allocation4 + $0x10] sm:$0xff]
        %v520 = vld [vmem:[#allocation4 + $0x18] sm:$0xff]
        %v521 = vld [vmem:[#allocation4 + $0x20] sm:$0xff]
        %v522 = vld [vmem:[#allocation4 + $0x28] sm:$0xff]
        %v523 = vld [vmem:[#allocation4 + $0x30] sm:$0xff]
        %v524 = vld [vmem:[#allocation4 + $0x38] sm:$0xff]
        %v525 = vld [vmem:[#allocation4 + $0x40] sm:$0xff]
        %v526 = vld [vmem:[#allocation4 + $0x48] sm:$0xff]
        %v527 = vld [vmem:[#allocation4 + $0x50] sm:$0xff]
        %v528 = vld [vmem:[#allocation4 + $0x58] sm:$0xff]
        %v529 = vld [vmem:[#allocation4 + $0x60] sm:$0xff]
        %v530 = vld [vmem:[#allocation4 + $0x68] sm:$0xff]
        %v531 = vld [vmem:[#allocation4 + $0x70] sm:$0xff]
        %v532 = vld [vmem:[#allocation4 + $0x78] sm:$0xff]
        %v533 = vld [vmem:[#allocation4 + $0x80] sm:$0xff]
        %v534 = vld [vmem:[#allocation4 + $0x88] sm:$0xff]
        %v535 = vld [vmem:[#allocation4 + $0x90] sm:$0xff]
        %v536 = vld [vmem:[#allocation4 + $0x98] sm:$0xff]
        %v537 = vld [vmem:[#allocation4 + $0xa0] sm:$0xff]
        %v538 = vld [vmem:[#allocation4 + $0xa8] sm:$0xff]
        %v539 = vld [vmem:[#allocation4 + $0xb0] sm:$0xff]
        %v540 = vld [vmem:[#allocation4 + $0xb8] sm:$0xff]
        %v541 = vld [vmem:[#allocation4 + $0xc0] sm:$0xff]
        %v542 = vld [vmem:[#allocation4 + $0xc8] sm:$0xff]
        %v543 = vld [vmem:[#allocation4 + $0xd0] sm:$0xff]
        %v544 = vld [vmem:[#allocation4 + $0xd8] sm:$0xff]
        %v545 = vld [vmem:[#allocation4 + $0xe0] sm:$0xff]
        %v546 = vld [vmem:[#allocation4 + $0xe8] sm:$0xff]
        %v547 = vld [vmem:[#allocation4 + $0xf0] sm:$0xff]
        %v548 = vld [vmem:[#allocation4 + $0xf8] sm:$0xff]
        %549 = vmatpush.xpose.msra.mxu0 %v500
        %550 = vmatpush.xpose.msra.mxu0 %v499
        %551 = vmatpush.xpose.msra.mxu0 %v498
        %552 = vmatpush.xpose.msra.mxu0 %v497
        %553 = vmatpush.xpose.msra.mxu0 %v496
        %554 = vmatpush.xpose.msra.mxu0 %v495
        %555 = vmatpush.xpose.msra.mxu0 %v494
        %556 = vmatpush.xpose.msra.mxu0 %v493
        %557 = vmatpush.xpose.msra.mxu0 %v492
        %558 = vmatpush.xpose.msra.mxu0 %v491
        %559 = vmatpush.xpose.msra.mxu0 %v490
        %560 = vmatpush.xpose.msra.mxu0 %v489
        %561 = vmatpush.xpose.msra.mxu0 %v488
        %562 = vmatpush.xpose.msra.mxu0 %v487
        %563 = vmatpush.xpose.msra.mxu0 %v486
        %564 = vmatpush.xpose.msra.mxu0 %v485
        %565 = vmatmul.f32.gmra.mxu0 %v517
        %v566 = vpop.f32.mrf.mxu0
        %v567 = vadd.f32 0.0, %v566
        %568 = vmatmul.f32.gmra.mxu0 %v518
        %v569 = vpop.f32.mrf.mxu0
        %v570 = vadd.f32 0.0, %v569
        %571 = vmatmul.f32.gmra.mxu0 %v519
        %v572 = vpop.f32.mrf.mxu0
        %v573 = vadd.f32 0.0, %v572
        %574 = vmatmul.f32.gmra.mxu0 %v520
        %v575 = vpop.f32.mrf.mxu0
        %v576 = vadd.f32 0.0, %v575
        %577 = vmatmul.f32.gmra.mxu0 %v521
        %v578 = vpop.f32.mrf.mxu0
        %v579 = vadd.f32 0.0, %v578
        %580 = vmatmul.f32.gmra.mxu0 %v522
        %v581 = vpop.f32.mrf.mxu0
        %v582 = vadd.f32 0.0, %v581
        %583 = vmatmul.f32.gmra.mxu0 %v523
        %v584 = vpop.f32.mrf.mxu0
        %v585 = vadd.f32 0.0, %v584
        %586 = vmatmul.f32.gmra.mxu0 %v524
        %v587 = vpop.f32.mrf.mxu0
        %v588 = vadd.f32 0.0, %v587
        %589 = vmatmul.f32.gmra.mxu0 %v525
        %v590 = vpop.f32.mrf.mxu0
        %v591 = vadd.f32 0.0, %v590
        %592 = vmatmul.f32.gmra.mxu0 %v526
        %v593 = vpop.f32.mrf.mxu0
        %v594 = vadd.f32 0.0, %v593
        %595 = vmatmul.f32.gmra.mxu0 %v527
        %v596 = vpop.f32.mrf.mxu0
        %v597 = vadd.f32 0.0, %v596
        %598 = vmatmul.f32.gmra.mxu0 %v528
        %v599 = vpop.f32.mrf.mxu0
        %v600 = vadd.f32 0.0, %v599
        %601 = vmatmul.f32.gmra.mxu0 %v529
        %v602 = vpop.f32.mrf.mxu0
        %v603 = vadd.f32 0.0, %v602
        %604 = vmatmul.f32.gmra.mxu0 %v530
        %v605 = vpop.f32.mrf.mxu0
        %v606 = vadd.f32 0.0, %v605
        %607 = vmatmul.f32.gmra.mxu0 %v531
        %v608 = vpop.f32.mrf.mxu0
        %v609 = vadd.f32 0.0, %v608
        %610 = vmatmul.f32.gmra.mxu0 %v532
        %v611 = vpop.f32.mrf.mxu0
        %v612 = vadd.f32 0.0, %v611
        %613 = vmatmul.f32.gmra.mxu0 %v533
        %v614 = vpop.f32.mrf.mxu0
        %v615 = vadd.f32 0.0, %v614
        %616 = vmatmul.f32.gmra.mxu0 %v534
        %v617 = vpop.f32.mrf.mxu0
        %v618 = vadd.f32 0.0, %v617
        %619 = vmatmul.f32.gmra.mxu0 %v535
        %v620 = vpop.f32.mrf.mxu0
        %v621 = vadd.f32 0.0, %v620
        %622 = vmatmul.f32.gmra.mxu0 %v536
        %v623 = vpop.f32.mrf.mxu0
        %v624 = vadd.f32 0.0, %v623
        %625 = vmatmul.f32.gmra.mxu0 %v537
        %v626 = vpop.f32.mrf.mxu0
        %v627 = vadd.f32 0.0, %v626
        %628 = vmatmul.f32.gmra.mxu0 %v538
        %v629 = vpop.f32.mrf.mxu0
        %v630 = vadd.f32 0.0, %v629
        %631 = vmatmul.f32.gmra.mxu0 %v539
        %v632 = vpop.f32.mrf.mxu0
        %v633 = vadd.f32 0.0, %v632
        %634 = vmatmul.f32.gmra.mxu0 %v540
        %v635 = vpop.f32.mrf.mxu0
        %v636 = vadd.f32 0.0, %v635
        %637 = vmatmul.f32.gmra.mxu0 %v541
        %v638 = vpop.f32.mrf.mxu0
        %v639 = vadd.f32 0.0, %v638
        %640 = vmatmul.f32.gmra.mxu0 %v542
        %v641 = vpop.f32.mrf.mxu0
        %v642 = vadd.f32 0.0, %v641
        %643 = vmatmul.f32.gmra.mxu0 %v543
        %v644 = vpop.f32.mrf.mxu0
        %v645 = vadd.f32 0.0, %v644
        %646 = vmatmul.f32.gmra.mxu0 %v544
        %v647 = vpop.f32.mrf.mxu0
        %v648 = vadd.f32 0.0, %v647
        %649 = vmatmul.f32.gmra.mxu0 %v545
        %v650 = vpop.f32.mrf.mxu0
        %v651 = vadd.f32 0.0, %v650
        %652 = vmatmul.f32.gmra.mxu0 %v546
        %v653 = vpop.f32.mrf.mxu0
        %v654 = vadd.f32 0.0, %v653
        %655 = vmatmul.f32.gmra.mxu0 %v547
        %v656 = vpop.f32.mrf.mxu0
        %v657 = vadd.f32 0.0, %v656
        %658 = vmatmul.f32.gmra.mxu0 %v548
        %v659 = vpop.f32.mrf.mxu0
        %v660 = vadd.f32 0.0, %v659
        %661 = vdwg.mxu0
        %662 = vmatpush.xpose.msra.mxu0 %v516
        %663 = vmatpush.xpose.msra.mxu0 %v515
        %664 = vmatpush.xpose.msra.mxu0 %v514
        %665 = vmatpush.xpose.msra.mxu0 %v513
        %666 = vmatpush.xpose.msra.mxu0 %v512
        %667 = vmatpush.xpose.msra.mxu0 %v511
        %668 = vmatpush.xpose.msra.mxu0 %v510
        %669 = vmatpush.xpose.msra.mxu0 %v509
        %670 = vmatpush.xpose.msra.mxu0 %v508
        %671 = vmatpush.xpose.msra.mxu0 %v507
        %672 = vmatpush.xpose.msra.mxu0 %v506
        %673 = vmatpush.xpose.msra.mxu0 %v505
        %674 = vmatpush.xpose.msra.mxu0 %v504
        %675 = vmatpush.xpose.msra.mxu0 %v503
        %676 = vmatpush.xpose.msra.mxu0 %v502
        %677 = vmatpush.xpose.msra.mxu0 %v501
        %678 = vmatmul.f32.gmra.mxu0 %v517
        %v679 = vpop.f32.mrf.mxu0
        %v680 = vadd.f32 0.0, %v679
        %681 = vmatmul.f32.gmra.mxu0 %v518
        %v682 = vpop.f32.mrf.mxu0
        %v683 = vadd.f32 0.0, %v682
        %684 = vmatmul.f32.gmra.mxu0 %v519
        %v685 = vpop.f32.mrf.mxu0
        %v686 = vadd.f32 0.0, %v685
        %687 = vmatmul.f32.gmra.mxu0 %v520
        %v688 = vpop.f32.mrf.mxu0
        %v689 = vadd.f32 0.0, %v688
        %690 = vmatmul.f32.gmra.mxu0 %v521
        %v691 = vpop.f32.mrf.mxu0
        %v692 = vadd.f32 0.0, %v691
        %693 = vmatmul.f32.gmra.mxu0 %v522
        %v694 = vpop.f32.mrf.mxu0
        %v695 = vadd.f32 0.0, %v694
        %696 = vmatmul.f32.gmra.mxu0 %v523
        %v697 = vpop.f32.mrf.mxu0
        %v698 = vadd.f32 0.0, %v697
        %699 = vmatmul.f32.gmra.mxu0 %v524
        %v700 = vpop.f32.mrf.mxu0
        %v701 = vadd.f32 0.0, %v700
        %702 = vmatmul.f32.gmra.mxu0 %v525
        %v703 = vpop.f32.mrf.mxu0
        %v704 = vadd.f32 0.0, %v703
        %705 = vmatmul.f32.gmra.mxu0 %v526
        %v706 = vpop.f32.mrf.mxu0
        %v707 = vadd.f32 0.0, %v706
        %708 = vmatmul.f32.gmra.mxu0 %v527
        %v709 = vpop.f32.mrf.mxu0
        %v710 = vadd.f32 0.0, %v709
        %711 = vmatmul.f32.gmra.mxu0 %v528
        %v712 = vpop.f32.mrf.mxu0
        %v713 = vadd.f32 0.0, %v712
        %714 = vmatmul.f32.gmra.mxu0 %v529
        %v715 = vpop.f32.mrf.mxu0
        %v716 = vadd.f32 0.0, %v715
        %717 = vmatmul.f32.gmra.mxu0 %v530
        %v718 = vpop.f32.mrf.mxu0
        %v719 = vadd.f32 0.0, %v718
        %720 = vmatmul.f32.gmra.mxu0 %v531
        %v721 = vpop.f32.mrf.mxu0
        %v722 = vadd.f32 0.0, %v721
        %723 = vmatmul.f32.gmra.mxu0 %v532
        %v724 = vpop.f32.mrf.mxu0
        %v725 = vadd.f32 0.0, %v724
        %726 = vmatmul.f32.gmra.mxu0 %v533
        %v727 = vpop.f32.mrf.mxu0
        %v728 = vadd.f32 0.0, %v727
        %729 = vmatmul.f32.gmra.mxu0 %v534
        %v730 = vpop.f32.mrf.mxu0
        %v731 = vadd.f32 0.0, %v730
        %732 = vmatmul.f32.gmra.mxu0 %v535
        %v733 = vpop.f32.mrf.mxu0
        %v734 = vadd.f32 0.0, %v733
        %735 = vmatmul.f32.gmra.mxu0 %v536
        %v736 = vpop.f32.mrf.mxu0
        %v737 = vadd.f32 0.0, %v736
        %738 = vmatmul.f32.gmra.mxu0 %v537
        %v739 = vpop.f32.mrf.mxu0
        %v740 = vadd.f32 0.0, %v739
        %741 = vmatmul.f32.gmra.mxu0 %v538
        %v742 = vpop.f32.mrf.mxu0
        %v743 = vadd.f32 0.0, %v742
        %744 = vmatmul.f32.gmra.mxu0 %v539
        %v745 = vpop.f32.mrf.mxu0
        %v746 = vadd.f32 0.0, %v745
        %747 = vmatmul.f32.gmra.mxu0 %v540
        %v748 = vpop.f32.mrf.mxu0
        %v749 = vadd.f32 0.0, %v748
        %750 = vmatmul.f32.gmra.mxu0 %v541
        %v751 = vpop.f32.mrf.mxu0
        %v752 = vadd.f32 0.0, %v751
        %753 = vmatmul.f32.gmra.mxu0 %v542
        %v754 = vpop.f32.mrf.mxu0
        %v755 = vadd.f32 0.0, %v754
        %756 = vmatmul.f32.gmra.mxu0 %v543
        %v757 = vpop.f32.mrf.mxu0
        %v758 = vadd.f32 0.0, %v757
        %759 = vmatmul.f32.gmra.mxu0 %v544
        %v760 = vpop.f32.mrf.mxu0
        %v761 = vadd.f32 0.0, %v760
        %762 = vmatmul.f32.gmra.mxu0 %v545
        %v763 = vpop.f32.mrf.mxu0
        %v764 = vadd.f32 0.0, %v763
        %765 = vmatmul.f32.gmra.mxu0 %v546
        %v766 = vpop.f32.mrf.mxu0
        %v767 = vadd.f32 0.0, %v766
        %768 = vmatmul.f32.gmra.mxu0 %v547
        %v769 = vpop.f32.mrf.mxu0
        %v770 = vadd.f32 0.0, %v769
        %771 = vmatmul.f32.gmra.mxu0 %v548
        %v772 = vpop.f32.mrf.mxu0
        %v773 = vadd.f32 0.0, %v772
        %774 = vdwg.mxu0
        %v775 = vmax.f32 %v567, %v680
        %776 = vmax.xlane.f32.xlu0 %v775
        %v777 = vpop.xlane.xlu0 %776
        %v778 = vmax.f32 %v570, %v683
        %779 = vmax.xlane.f32.xlu0 %v778
        %v780 = vpop.xlane.xlu0 %779
        %v781 = vmax.f32 %v573, %v686
        %782 = vmax.xlane.f32.xlu0 %v781
        %v783 = vpop.xlane.xlu0 %782
        %v784 = vmax.f32 %v576, %v689
        %785 = vmax.xlane.f32.xlu0 %v784
        %v786 = vpop.xlane.xlu0 %785
        %v787 = vmax.f32 %v579, %v692
        %788 = vmax.xlane.f32.xlu0 %v787
        %v789 = vpop.xlane.xlu0 %788
        %v790 = vmax.f32 %v582, %v695
        %791 = vmax.xlane.f32.xlu0 %v790
        %v792 = vpop.xlane.xlu0 %791
        %v793 = vmax.f32 %v585, %v698
        %794 = vmax.xlane.f32.xlu0 %v793
        %v795 = vpop.xlane.xlu0 %794
        %v796 = vmax.f32 %v588, %v701
        %797 = vmax.xlane.f32.xlu0 %v796
        %v798 = vpop.xlane.xlu0 %797
        %v799 = vmax.f32 %v591, %v704
        %800 = vmax.xlane.f32.xlu0 %v799
        %v801 = vpop.xlane.xlu0 %800
        %v802 = vmax.f32 %v594, %v707
        %803 = vmax.xlane.f32.xlu0 %v802
        %v804 = vpop.xlane.xlu0 %803
        %v805 = vmax.f32 %v597, %v710
        %806 = vmax.xlane.f32.xlu0 %v805
        %v807 = vpop.xlane.xlu0 %806
        %v808 = vmax.f32 %v600, %v713
        %809 = vmax.xlane.f32.xlu0 %v808
        %v810 = vpop.xlane.xlu0 %809
        %v811 = vmax.f32 %v603, %v716
        %812 = vmax.xlane.f32.xlu0 %v811
        %v813 = vpop.xlane.xlu0 %812
        %v814 = vmax.f32 %v606, %v719
        %815 = vmax.xlane.f32.xlu0 %v814
        %v816 = vpop.xlane.xlu0 %815
        %v817 = vmax.f32 %v609, %v722
        %818 = vmax.xlane.f32.xlu0 %v817
        %v819 = vpop.xlane.xlu0 %818
        %v820 = vmax.f32 %v612, %v725
        %821 = vmax.xlane.f32.xlu0 %v820
        %v822 = vpop.xlane.xlu0 %821
        %v823 = vmax.f32 %v615, %v728
        %824 = vmax.xlane.f32.xlu0 %v823
        %v825 = vpop.xlane.xlu0 %824
        %v826 = vmax.f32 %v618, %v731
        %827 = vmax.xlane.f32.xlu0 %v826
        %v828 = vpop.xlane.xlu0 %827
        %v829 = vmax.f32 %v621, %v734
        %830 = vmax.xlane.f32.xlu0 %v829
        %v831 = vpop.xlane.xlu0 %830
        %v832 = vmax.f32 %v624, %v737
        %833 = vmax.xlane.f32.xlu0 %v832
        %v834 = vpop.xlane.xlu0 %833
        %v835 = vmax.f32 %v627, %v740
        %836 = vmax.xlane.f32.xlu0 %v835
        %v837 = vpop.xlane.xlu0 %836
        %v838 = vmax.f32 %v630, %v743
        %839 = vmax.xlane.f32.xlu0 %v838
        %v840 = vpop.xlane.xlu0 %839
        %v841 = vmax.f32 %v633, %v746
        %842 = vmax.xlane.f32.xlu0 %v841
        %v843 = vpop.xlane.xlu0 %842
        %v844 = vmax.f32 %v636, %v749
        %845 = vmax.xlane.f32.xlu0 %v844
        %v846 = vpop.xlane.xlu0 %845
        %v847 = vmax.f32 %v639, %v752
        %848 = vmax.xlane.f32.xlu0 %v847
        %v849 = vpop.xlane.xlu0 %848
        %v850 = vmax.f32 %v642, %v755
        %851 = vmax.xlane.f32.xlu0 %v850
        %v852 = vpop.xlane.xlu0 %851
        %v853 = vmax.f32 %v645, %v758
        %854 = vmax.xlane.f32.xlu0 %v853
        %v855 = vpop.xlane.xlu0 %854
        %v856 = vmax.f32 %v648, %v761
        %857 = vmax.xlane.f32.xlu0 %v856
        %v858 = vpop.xlane.xlu0 %857
        %v859 = vmax.f32 %v651, %v764
        %860 = vmax.xlane.f32.xlu0 %v859
        %v861 = vpop.xlane.xlu0 %860
        %v862 = vmax.f32 %v654, %v767
        %863 = vmax.xlane.f32.xlu0 %v862
        %v864 = vpop.xlane.xlu0 %863
        %v865 = vmax.f32 %v657, %v770
        %866 = vmax.xlane.f32.xlu0 %v865
        %v867 = vpop.xlane.xlu0 %866
        %v868 = vmax.f32 %v660, %v773
        %869 = vmax.xlane.f32.xlu0 %v868
        %v870 = vpop.xlane.xlu0 %869
        %v871 = vmax.f32 %v567, %v573
        %v872 = vmax.f32 %v570, %v576
        %v873 = vmax.f32 %v871, %v579
        %v874 = vmax.f32 %v872, %v582
        %v875 = vmax.f32 %v873, %v585
        %v876 = vmax.f32 %v874, %v588
        %v877 = vmax.f32 %v875, %v591
        %v878 = vmax.f32 %v876, %v594
        %v879 = vmax.f32 %v877, %v597
        %v880 = vmax.f32 %v878, %v600
        %v881 = vmax.f32 %v879, %v603
        %v882 = vmax.f32 %v880, %v606
        %v883 = vmax.f32 %v881, %v609
        %v884 = vmax.f32 %v882, %v612
        %v885 = vmax.f32 %v883, %v615
        %v886 = vmax.f32 %v884, %v618
        %v887 = vmax.f32 %v885, %v621
        %v888 = vmax.f32 %v886, %v624
        %v889 = vmax.f32 %v887, %v627
        %v890 = vmax.f32 %v888, %v630
        %v891 = vmax.f32 %v889, %v633
        %v892 = vmax.f32 %v890, %v636
        %v893 = vmax.f32 %v891, %v639
        %v894 = vmax.f32 %v892, %v642
        %v895 = vmax.f32 %v893, %v645
        %v896 = vmax.f32 %v894, %v648
        %v897 = vmax.f32 %v895, %v651
        %v898 = vmax.f32 %v896, %v654
        %v899 = vmax.f32 %v897, %v657
        %v900 = vmax.f32 %v898, %v660
        %v901 = vmax.f32 %v899, %v900
        %v902 = vrot.slane %v901, 4
        %v903 = vmax.f32 %v901, %v902
        %v904 = vrot.slane %v903, 2
        %v905 = vmax.f32 %v903, %v904
        %v906 = vrot.slane %v905, 1
        %v907 = vmax.f32 %v905, %v906
        %v908 = vmax.f32 %v680, %v686
        %v909 = vmax.f32 %v683, %v689
        %v910 = vmax.f32 %v908, %v692
        %v911 = vmax.f32 %v909, %v695
        %v912 = vmax.f32 %v910, %v698
        %v913 = vmax.f32 %v911, %v701
        %v914 = vmax.f32 %v912, %v704
        %v915 = vmax.f32 %v913, %v707
        %v916 = vmax.f32 %v914, %v710
        %v917 = vmax.f32 %v915, %v713
        %v918 = vmax.f32 %v916, %v716
        %v919 = vmax.f32 %v917, %v719
        %v920 = vmax.f32 %v918, %v722
        %v921 = vmax.f32 %v919, %v725
        %v922 = vmax.f32 %v920, %v728
        %v923 = vmax.f32 %v921, %v731
        %v924 = vmax.f32 %v922, %v734
        %v925 = vmax.f32 %v923, %v737
        %v926 = vmax.f32 %v924, %v740
        %v927 = vmax.f32 %v925, %v743
        %v928 = vmax.f32 %v926, %v746
        %v929 = vmax.f32 %v927, %v749
        %v930 = vmax.f32 %v928, %v752
        %v931 = vmax.f32 %v929, %v755
        %v932 = vmax.f32 %v930, %v758
        %v933 = vmax.f32 %v931, %v761
        %v934 = vmax.f32 %v932, %v764
        %v935 = vmax.f32 %v933, %v767
        %v936 = vmax.f32 %v934, %v770
        %v937 = vmax.f32 %v935, %v773
        %v938 = vmax.f32 %v936, %v937
        %v939 = vrot.slane %v938, 4
        %v940 = vmax.f32 %v938, %v939
        %v941 = vrot.slane %v940, 2
        %v942 = vmax.f32 %v940, %v941
        %v943 = vrot.slane %v942, 1
        %v944 = vmax.f32 %v942, %v943
        %v945 = vmax.f32 %v777, %v789
        %v946 = vmax.f32 %v780, %v792
        %v947 = vmax.f32 %v783, %v795
        %v948 = vmax.f32 %v786, %v798
        %v949 = vmax.f32 %v945, %v801
        %v950 = vmax.f32 %v946, %v804
        %v951 = vmax.f32 %v947, %v807
        %v952 = vmax.f32 %v948, %v810
        %v953 = vmax.f32 %v949, %v813
        %v954 = vmax.f32 %v950, %v816
        %v955 = vmax.f32 %v951, %v819
        %v956 = vmax.f32 %v952, %v822
        %v957 = vmax.f32 %v953, %v825
        %v958 = vmax.f32 %v954, %v828
        %v959 = vmax.f32 %v955, %v831
        %v960 = vmax.f32 %v956, %v834
        %v961 = vmax.f32 %v957, %v837
        %v962 = vmax.f32 %v958, %v840
        %v963 = vmax.f32 %v959, %v843
        %v964 = vmax.f32 %v960, %v846
        %v965 = vmax.f32 %v961, %v849
        %v966 = vmax.f32 %v962, %v852
        %v967 = vmax.f32 %v963, %v855
        %v968 = vmax.f32 %v964, %v858
        %v969 = vmax.f32 %v965, %v861
        %v970 = vmax.f32 %v966, %v864
        %v971 = vmax.f32 %v967, %v867
        %v972 = vmax.f32 %v968, %v870
        %v973 = vmax.f32 %v969, %v970
        %v974 = vmax.f32 %v971, %v972
        %v975 = vmax.f32 %v973, %v974
        %v976 = vrot.slane %v975, 4
        %v977 = vmax.f32 %v975, %v976
        %v978 = vrot.slane %v977, 2
        %v979 = vmax.f32 %v977, %v978
        %v980 = vrot.slane %v979, 1
        %v981 = vmax.f32 %v979, %v980
        %s982 = vtos %v981
        %v983 = vstv %s982
        %v984 = vsub.f32 %v567, %v983
        %v985 = vsub.f32 %v680, %v983
        %v986 = vsub.f32 %v570, %v983
        %v987 = vsub.f32 %v683, %v983
        %v988 = vsub.f32 %v573, %v983
        %v989 = vsub.f32 %v686, %v983
        %v990 = vsub.f32 %v576, %v983
        %v991 = vsub.f32 %v689, %v983
        %v992 = vsub.f32 %v579, %v983
        %v993 = vsub.f32 %v692, %v983
        %v994 = vsub.f32 %v582, %v983
        %v995 = vsub.f32 %v695, %v983
        %v996 = vsub.f32 %v585, %v983
        %v997 = vsub.f32 %v698, %v983
        %v998 = vsub.f32 %v588, %v983
        %v999 = vsub.f32 %v701, %v983
        %v1000 = vsub.f32 %v591, %v983
        %v1001 = vsub.f32 %v704, %v983
        %v1002 = vsub.f32 %v594, %v983
        %v1003 = vsub.f32 %v707, %v983
        %v1004 = vsub.f32 %v597, %v983
        %v1005 = vsub.f32 %v710, %v983
        %v1006 = vsub.f32 %v600, %v983
        %v1007 = vsub.f32 %v713, %v983
        %v1008 = vsub.f32 %v603, %v983
        %v1009 = vsub.f32 %v716, %v983
        %v1010 = vsub.f32 %v606, %v983
        %v1011 = vsub.f32 %v719, %v983
        %v1012 = vsub.f32 %v609, %v983
        %v1013 = vsub.f32 %v722, %v983
        %v1014 = vsub.f32 %v612, %v983
        %v1015 = vsub.f32 %v725, %v983
        %v1016 = vsub.f32 %v615, %v983
        %v1017 = vsub.f32 %v728, %v983
        %v1018 = vsub.f32 %v618, %v983
        %v1019 = vsub.f32 %v731, %v983
        %v1020 = vsub.f32 %v621, %v983
        %v1021 = vsub.f32 %v734, %v983
        %v1022 = vsub.f32 %v624, %v983
        %v1023 = vsub.f32 %v737, %v983
        %v1024 = vsub.f32 %v627, %v983
        %v1025 = vsub.f32 %v740, %v983
        %v1026 = vsub.f32 %v630, %v983
        %v1027 = vsub.f32 %v743, %v983
        %v1028 = vsub.f32 %v633, %v983
        %v1029 = vsub.f32 %v746, %v983
        %v1030 = vsub.f32 %v636, %v983
        %v1031 = vsub.f32 %v749, %v983
        %v1032 = vsub.f32 %v639, %v983
        %v1033 = vsub.f32 %v752, %v983
        %v1034 = vsub.f32 %v642, %v983
        %v1035 = vsub.f32 %v755, %v983
        %v1036 = vsub.f32 %v645, %v983
        %v1037 = vsub.f32 %v758, %v983
        %v1038 = vsub.f32 %v648, %v983
        %v1039 = vsub.f32 %v761, %v983
        %v1040 = vsub.f32 %v651, %v983
        %v1041 = vsub.f32 %v764, %v983
        %v1042 = vsub.f32 %v654, %v983
        %v1043 = vsub.f32 %v767, %v983
        %v1044 = vsub.f32 %v657, %v983
        %v1045 = vsub.f32 %v770, %v983
        %v1046 = vsub.f32 %v660, %v983
        %v1047 = vsub.f32 %v773, %v983
        %v1048 = vmul.f32 %v984, 1.442695
        %v1049 = vpow.pop %v1048
        %v1050 = vmul.f32 %v985, 1.442695
        %v1051 = vpow.pop %v1050
        %v1052 = vmul.f32 %v986, 1.442695
        %v1053 = vpow.pop %v1052
        %v1054 = vmul.f32 %v987, 1.442695
        %v1055 = vpow.pop %v1054
        %v1056 = vmul.f32 %v988, 1.442695
        %v1057 = vpow.pop %v1056
        %v1058 = vmul.f32 %v989, 1.442695
        %v1059 = vpow.pop %v1058
        %v1060 = vmul.f32 %v990, 1.442695
        %v1061 = vpow.pop %v1060
        %v1062 = vmul.f32 %v991, 1.442695
        %v1063 = vpow.pop %v1062
        %v1064 = vmul.f32 %v992, 1.442695
        %v1065 = vpow.pop %v1064
        %v1066 = vmul.f32 %v993, 1.442695
        %v1067 = vpow.pop %v1066
        %v1068 = vmul.f32 %v994, 1.442695
        %v1069 = vpow.pop %v1068
        %v1070 = vmul.f32 %v995, 1.442695
        %v1071 = vpow.pop %v1070
        %v1072 = vmul.f32 %v996, 1.442695
        %v1073 = vpow.pop %v1072
        %v1074 = vmul.f32 %v997, 1.442695
        %v1075 = vpow.pop %v1074
        %v1076 = vmul.f32 %v998, 1.442695
        %v1077 = vpow.pop %v1076
        %v1078 = vmul.f32 %v999, 1.442695
        %v1079 = vpow.pop %v1078
        %v1080 = vmul.f32 %v1000, 1.442695
        %v1081 = vpow.pop %v1080
        %v1082 = vmul.f32 %v1001, 1.442695
        %v1083 = vpow.pop %v1082
        %v1084 = vmul.f32 %v1002, 1.442695
        %v1085 = vpow.pop %v1084
        %v1086 = vmul.f32 %v1003, 1.442695
        %v1087 = vpow.pop %v1086
        %v1088 = vmul.f32 %v1004, 1.442695
        %v1089 = vpow.pop %v1088
        %v1090 = vmul.f32 %v1005, 1.442695
        %v1091 = vpow.pop %v1090
        %v1092 = vmul.f32 %v1006, 1.442695
        %v1093 = vpow.pop %v1092
        %v1094 = vmul.f32 %v1007, 1.442695
        %v1095 = vpow.pop %v1094
        %v1096 = vmul.f32 %v1008, 1.442695
        %v1097 = vpow.pop %v1096
        %v1098 = vmul.f32 %v1009, 1.442695
        %v1099 = vpow.pop %v1098
        %v1100 = vmul.f32 %v1010, 1.442695
        %v1101 = vpow.pop %v1100
        %v1102 = vmul.f32 %v1011, 1.442695
        %v1103 = vpow.pop %v1102
        %v1104 = vmul.f32 %v1012, 1.442695
        %v1105 = vpow.pop %v1104
        %v1106 = vmul.f32 %v1013, 1.442695
        %v1107 = vpow.pop %v1106
        %v1108 = vmul.f32 %v1014, 1.442695
        %v1109 = vpow.pop %v1108
        %v1110 = vmul.f32 %v1015, 1.442695
        %v1111 = vpow.pop %v1110
        %v1112 = vmul.f32 %v1016, 1.442695
        %v1113 = vpow.pop %v1112
        %v1114 = vmul.f32 %v1017, 1.442695
        %v1115 = vpow.pop %v1114
        %v1116 = vmul.f32 %v1018, 1.442695
        %v1117 = vpow.pop %v1116
        %v1118 = vmul.f32 %v1019, 1.442695
        %v1119 = vpow.pop %v1118
        %v1120 = vmul.f32 %v1020, 1.442695
        %v1121 = vpow.pop %v1120
        %v1122 = vmul.f32 %v1021, 1.442695
        %v1123 = vpow.pop %v1122
        %v1124 = vmul.f32 %v1022, 1.442695
        %v1125 = vpow.pop %v1124
        %v1126 = vmul.f32 %v1023, 1.442695
        %v1127 = vpow.pop %v1126
        %v1128 = vmul.f32 %v1024, 1.442695
        %v1129 = vpow.pop %v1128
        %v1130 = vmul.f32 %v1025, 1.442695
        %v1131 = vpow.pop %v1130
        %v1132 = vmul.f32 %v1026, 1.442695
        %v1133 = vpow.pop %v1132
        %v1134 = vmul.f32 %v1027, 1.442695
        %v1135 = vpow.pop %v1134
        %v1136 = vmul.f32 %v1028, 1.442695
        %v1137 = vpow.pop %v1136
        %v1138 = vmul.f32 %v1029, 1.442695
        %v1139 = vpow.pop %v1138
        %v1140 = vmul.f32 %v1030, 1.442695
        %v1141 = vpow.pop %v1140
        %v1142 = vmul.f32 %v1031, 1.442695
        %v1143 = vpow.pop %v1142
        %v1144 = vmul.f32 %v1032, 1.442695
        %v1145 = vpow.pop %v1144
        %v1146 = vmul.f32 %v1033, 1.442695
        %v1147 = vpow.pop %v1146
        %v1148 = vmul.f32 %v1034, 1.442695
        %v1149 = vpow.pop %v1148
        %v1150 = vmul.f32 %v1035, 1.442695
        %v1151 = vpow.pop %v1150
        %v1152 = vmul.f32 %v1036, 1.442695
        %v1153 = vpow.pop %v1152
        %v1154 = vmul.f32 %v1037, 1.442695
        %v1155 = vpow.pop %v1154
        %v1156 = vmul.f32 %v1038, 1.442695
        %v1157 = vpow.pop %v1156
        %v1158 = vmul.f32 %v1039, 1.442695
        %v1159 = vpow.pop %v1158
        %v1160 = vmul.f32 %v1040, 1.442695
        %v1161 = vpow.pop %v1160
        %v1162 = vmul.f32 %v1041, 1.442695
        %v1163 = vpow.pop %v1162
        %v1164 = vmul.f32 %v1042, 1.442695
        %v1165 = vpow.pop %v1164
        %v1166 = vmul.f32 %v1043, 1.442695
        %v1167 = vpow.pop %v1166
        %v1168 = vmul.f32 %v1044, 1.442695
        %v1169 = vpow.pop %v1168
        %v1170 = vmul.f32 %v1045, 1.442695
        %v1171 = vpow.pop %v1170
        %v1172 = vmul.f32 %v1046, 1.442695
        %v1173 = vpow.pop %v1172
        %v1174 = vmul.f32 %v1047, 1.442695
        %v1175 = vpow.pop %v1174
        %v1176 = vadd.f32 %v1049, %v1051
        %1177 = vadd.xlane.f32.xlu0 %v1176
        %v1178 = vpop.xlane.xlu0 %1177
        %v1179 = vadd.f32 %v1053, %v1055
        %1180 = vadd.xlane.f32.xlu0 %v1179
        %v1181 = vpop.xlane.xlu0 %1180
        %v1182 = vadd.f32 %v1057, %v1059
        %1183 = vadd.xlane.f32.xlu0 %v1182
        %v1184 = vpop.xlane.xlu0 %1183
        %v1185 = vadd.f32 %v1061, %v1063
        %1186 = vadd.xlane.f32.xlu0 %v1185
        %v1187 = vpop.xlane.xlu0 %1186
        %v1188 = vadd.f32 %v1065, %v1067
        %1189 = vadd.xlane.f32.xlu0 %v1188
        %v1190 = vpop.xlane.xlu0 %1189
        %v1191 = vadd.f32 %v1069, %v1071
        %1192 = vadd.xlane.f32.xlu0 %v1191
        %v1193 = vpop.xlane.xlu0 %1192
        %v1194 = vadd.f32 %v1073, %v1075
        %1195 = vadd.xlane.f32.xlu0 %v1194
        %v1196 = vpop.xlane.xlu0 %1195
        %v1197 = vadd.f32 %v1077, %v1079
        %1198 = vadd.xlane.f32.xlu0 %v1197
        %v1199 = vpop.xlane.xlu0 %1198
        %v1200 = vadd.f32 %v1081, %v1083
        %1201 = vadd.xlane.f32.xlu0 %v1200
        %v1202 = vpop.xlane.xlu0 %1201
        %v1203 = vadd.f32 %v1085, %v1087
        %1204 = vadd.xlane.f32.xlu0 %v1203
        %v1205 = vpop.xlane.xlu0 %1204
        %v1206 = vadd.f32 %v1089, %v1091
        %1207 = vadd.xlane.f32.xlu0 %v1206
        %v1208 = vpop.xlane.xlu0 %1207
        %v1209 = vadd.f32 %v1093, %v1095
        %1210 = vadd.xlane.f32.xlu0 %v1209
        %v1211 = vpop.xlane.xlu0 %1210
        %v1212 = vadd.f32 %v1097, %v1099
        %1213 = vadd.xlane.f32.xlu0 %v1212
        %v1214 = vpop.xlane.xlu0 %1213
        %v1215 = vadd.f32 %v1101, %v1103
        %1216 = vadd.xlane.f32.xlu0 %v1215
        %v1217 = vpop.xlane.xlu0 %1216
        %v1218 = vadd.f32 %v1105, %v1107
        %1219 = vadd.xlane.f32.xlu0 %v1218
        %v1220 = vpop.xlane.xlu0 %1219
        %v1221 = vadd.f32 %v1109, %v1111
        %1222 = vadd.xlane.f32.xlu0 %v1221
        %v1223 = vpop.xlane.xlu0 %1222
        %v1224 = vadd.f32 %v1113, %v1115
        %1225 = vadd.xlane.f32.xlu0 %v1224
        %v1226 = vpop.xlane.xlu0 %1225
        %v1227 = vadd.f32 %v1117, %v1119
        %1228 = vadd.xlane.f32.xlu0 %v1227
        %v1229 = vpop.xlane.xlu0 %1228
        %v1230 = vadd.f32 %v1121, %v1123
        %1231 = vadd.xlane.f32.xlu0 %v1230
        %v1232 = vpop.xlane.xlu0 %1231
        %v1233 = vadd.f32 %v1125, %v1127
        %1234 = vadd.xlane.f32.xlu0 %v1233
        %v1235 = vpop.xlane.xlu0 %1234
        %v1236 = vadd.f32 %v1129, %v1131
        %1237 = vadd.xlane.f32.xlu0 %v1236
        %v1238 = vpop.xlane.xlu0 %1237
        %v1239 = vadd.f32 %v1133, %v1135
        %1240 = vadd.xlane.f32.xlu0 %v1239
        %v1241 = vpop.xlane.xlu0 %1240
        %v1242 = vadd.f32 %v1137, %v1139
        %1243 = vadd.xlane.f32.xlu0 %v1242
        %v1244 = vpop.xlane.xlu0 %1243
        %v1245 = vadd.f32 %v1141, %v1143
        %1246 = vadd.xlane.f32.xlu0 %v1245
        %v1247 = vpop.xlane.xlu0 %1246
        %v1248 = vadd.f32 %v1145, %v1147
        %1249 = vadd.xlane.f32.xlu0 %v1248
        %v1250 = vpop.xlane.xlu0 %1249
        %v1251 = vadd.f32 %v1149, %v1151
        %1252 = vadd.xlane.f32.xlu0 %v1251
        %v1253 = vpop.xlane.xlu0 %1252
        %v1254 = vadd.f32 %v1153, %v1155
        %1255 = vadd.xlane.f32.xlu0 %v1254
        %v1256 = vpop.xlane.xlu0 %1255
        %v1257 = vadd.f32 %v1157, %v1159
        %1258 = vadd.xlane.f32.xlu0 %v1257
        %v1259 = vpop.xlane.xlu0 %1258
        %v1260 = vadd.f32 %v1161, %v1163
        %1261 = vadd.xlane.f32.xlu0 %v1260
        %v1262 = vpop.xlane.xlu0 %1261
        %v1263 = vadd.f32 %v1165, %v1167
        %1264 = vadd.xlane.f32.xlu0 %v1263
        %v1265 = vpop.xlane.xlu0 %1264
        %v1266 = vadd.f32 %v1169, %v1171
        %1267 = vadd.xlane.f32.xlu0 %v1266
        %v1268 = vpop.xlane.xlu0 %1267
        %v1269 = vadd.f32 %v1173, %v1175
        %1270 = vadd.xlane.f32.xlu0 %v1269
        %v1271 = vpop.xlane.xlu0 %1270
        %v1272 = vadd.f32 %v1049, %v1053
        %v1273 = vadd.f32 %v1272, %v1057
        %v1274 = vadd.f32 %v1273, %v1061
        %v1275 = vadd.f32 %v1274, %v1065
        %v1276 = vadd.f32 %v1275, %v1069
        %v1277 = vadd.f32 %v1276, %v1073
        %v1278 = vadd.f32 %v1277, %v1077
        %v1279 = vadd.f32 %v1278, %v1081
        %v1280 = vadd.f32 %v1279, %v1085
        %v1281 = vadd.f32 %v1280, %v1089
        %v1282 = vadd.f32 %v1281, %v1093
        %v1283 = vadd.f32 %v1282, %v1097
        %v1284 = vadd.f32 %v1283, %v1101
        %v1285 = vadd.f32 %v1284, %v1105
        %v1286 = vadd.f32 %v1285, %v1109
        %v1287 = vadd.f32 %v1286, %v1113
        %v1288 = vadd.f32 %v1287, %v1117
        %v1289 = vadd.f32 %v1288, %v1121
        %v1290 = vadd.f32 %v1289, %v1125
        %v1291 = vadd.f32 %v1290, %v1129
        %v1292 = vadd.f32 %v1291, %v1133
        %v1293 = vadd.f32 %v1292, %v1137
        %v1294 = vadd.f32 %v1293, %v1141
        %v1295 = vadd.f32 %v1294, %v1145
        %v1296 = vadd.f32 %v1295, %v1149
        %v1297 = vadd.f32 %v1296, %v1153
        %v1298 = vadd.f32 %v1297, %v1157
        %v1299 = vadd.f32 %v1298, %v1161
        %v1300 = vadd.f32 %v1299, %v1165
        %v1301 = vadd.f32 %v1300, %v1169
        %v1302 = vadd.f32 %v1301, %v1173
        %v1303 = vrot.slane %v1302, 4
        %v1304 = vadd.f32 %v1302, %v1303
        %v1305 = vrot.slane %v1304, 2
        %v1306 = vadd.f32 %v1304, %v1305
        %v1307 = vrot.slane %v1306, 1
        %v1308 = vadd.f32 %v1306, %v1307
        %v1309 = vadd.f32 %v1051, %v1055
        %v1310 = vadd.f32 %v1309, %v1059
        %v1311 = vadd.f32 %v1310, %v1063
        %v1312 = vadd.f32 %v1311, %v1067
        %v1313 = vadd.f32 %v1312, %v1071
        %v1314 = vadd.f32 %v1313, %v1075
        %v1315 = vadd.f32 %v1314, %v1079
        %v1316 = vadd.f32 %v1315, %v1083
        %v1317 = vadd.f32 %v1316, %v1087
        %v1318 = vadd.f32 %v1317, %v1091
        %v1319 = vadd.f32 %v1318, %v1095
        %v1320 = vadd.f32 %v1319, %v1099
        %v1321 = vadd.f32 %v1320, %v1103
        %v1322 = vadd.f32 %v1321, %v1107
        %v1323 = vadd.f32 %v1322, %v1111
        %v1324 = vadd.f32 %v1323, %v1115
        %v1325 = vadd.f32 %v1324, %v1119
        %v1326 = vadd.f32 %v1325, %v1123
        %v1327 = vadd.f32 %v1326, %v1127
        %v1328 = vadd.f32 %v1327, %v1131
        %v1329 = vadd.f32 %v1328, %v1135
        %v1330 = vadd.f32 %v1329, %v1139
        %v1331 = vadd.f32 %v1330, %v1143
        %v1332 = vadd.f32 %v1331, %v1147
        %v1333 = vadd.f32 %v1332, %v1151
        %v1334 = vadd.f32 %v1333, %v1155
        %v1335 = vadd.f32 %v1334, %v1159
        %v1336 = vadd.f32 %v1335, %v1163
        %v1337 = vadd.f32 %v1336, %v1167
        %v1338 = vadd.f32 %v1337, %v1171
        %v1339 = vadd.f32 %v1338, %v1175
        %v1340 = vrot.slane %v1339, 4
        %v1341 = vadd.f32 %v1339, %v1340
        %v1342 = vrot.slane %v1341, 2
        %v1343 = vadd.f32 %v1341, %v1342
        %v1344 = vrot.slane %v1343, 1
        %v1345 = vadd.f32 %v1343, %v1344
        %v1346 = vld [vmem:[#allocation2] sm:$0xff]
        %v1347 = vld [vmem:[#allocation2 + $0x8] sm:$0xff]
        %v1348 = vld [vmem:[#allocation2 + $0x10] sm:$0xff]
        %v1349 = vld [vmem:[#allocation2 + $0x18] sm:$0xff]
        %v1350 = vld [vmem:[#allocation2 + $0x20] sm:$0xff]
        %v1351 = vld [vmem:[#allocation2 + $0x28] sm:$0xff]
        %v1352 = vld [vmem:[#allocation2 + $0x30] sm:$0xff]
        %v1353 = vld [vmem:[#allocation2 + $0x38] sm:$0xff]
        %v1354 = vld [vmem:[#allocation2 + $0x40] sm:$0xff]
        %v1355 = vld [vmem:[#allocation2 + $0x48] sm:$0xff]
        %v1356 = vld [vmem:[#allocation2 + $0x50] sm:$0xff]
        %v1357 = vld [vmem:[#allocation2 + $0x58] sm:$0xff]
        %v1358 = vld [vmem:[#allocation2 + $0x60] sm:$0xff]
        %v1359 = vld [vmem:[#allocation2 + $0x68] sm:$0xff]
        %v1360 = vld [vmem:[#allocation2 + $0x70] sm:$0xff]
        %v1361 = vld [vmem:[#allocation2 + $0x78] sm:$0xff]
        %v1362 = vld [vmem:[#allocation2 + $0x80] sm:$0xff]
        %v1363 = vld [vmem:[#allocation2 + $0x88] sm:$0xff]
        %v1364 = vld [vmem:[#allocation2 + $0x90] sm:$0xff]
        %v1365 = vld [vmem:[#allocation2 + $0x98] sm:$0xff]
        %v1366 = vld [vmem:[#allocation2 + $0xa0] sm:$0xff]
        %v1367 = vld [vmem:[#allocation2 + $0xa8] sm:$0xff]
        %v1368 = vld [vmem:[#allocation2 + $0xb0] sm:$0xff]
        %v1369 = vld [vmem:[#allocation2 + $0xb8] sm:$0xff]
        %v1370 = vld [vmem:[#allocation2 + $0xc0] sm:$0xff]
        %v1371 = vld [vmem:[#allocation2 + $0xc8] sm:$0xff]
        %v1372 = vld [vmem:[#allocation2 + $0xd0] sm:$0xff]
        %v1373 = vld [vmem:[#allocation2 + $0xd8] sm:$0xff]
        %v1374 = vld [vmem:[#allocation2 + $0xe0] sm:$0xff]
        %v1375 = vld [vmem:[#allocation2 + $0xe8] sm:$0xff]
        %v1376 = vld [vmem:[#allocation2 + $0xf0] sm:$0xff]
        %v1377 = vld [vmem:[#allocation2 + $0xf8] sm:$0xff]
        %v1378 = vmax.f32 %v1346, %v777
        %v1379 = vmax.f32 %v1347, %v780
        %v1380 = vmax.f32 %v1348, %v783
        %v1381 = vmax.f32 %v1349, %v786
        %v1382 = vmax.f32 %v1350, %v789
        %v1383 = vmax.f32 %v1351, %v792
        %v1384 = vmax.f32 %v1352, %v795
        %v1385 = vmax.f32 %v1353, %v798
        %v1386 = vmax.f32 %v1354, %v801
        %v1387 = vmax.f32 %v1355, %v804
        %v1388 = vmax.f32 %v1356, %v807
        %v1389 = vmax.f32 %v1357, %v810
        %v1390 = vmax.f32 %v1358, %v813
        %v1391 = vmax.f32 %v1359, %v816
        %v1392 = vmax.f32 %v1360, %v819
        %v1393 = vmax.f32 %v1361, %v822
        %v1394 = vmax.f32 %v1362, %v825
        %v1395 = vmax.f32 %v1363, %v828
        %v1396 = vmax.f32 %v1364, %v831
        %v1397 = vmax.f32 %v1365, %v834
        %v1398 = vmax.f32 %v1366, %v837
        %v1399 = vmax.f32 %v1367, %v840
        %v1400 = vmax.f32 %v1368, %v843
        %v1401 = vmax.f32 %v1369, %v846
        %v1402 = vmax.f32 %v1370, %v849
        %v1403 = vmax.f32 %v1371, %v852
        %v1404 = vmax.f32 %v1372, %v855
        %v1405 = vmax.f32 %v1373, %v858
        %v1406 = vmax.f32 %v1374, %v861
        %v1407 = vmax.f32 %v1375, %v864
        %v1408 = vmax.f32 %v1376, %v867
        %v1409 = vmax.f32 %v1377, %v870
        %v1410 = vsub.f32 %v983, %v1378
        %v1411 = vsub.f32 %v983, %v1379
        %v1412 = vsub.f32 %v983, %v1380
        %v1413 = vsub.f32 %v983, %v1381
        %v1414 = vsub.f32 %v983, %v1382
        %v1415 = vsub.f32 %v983, %v1383
        %v1416 = vsub.f32 %v983, %v1384
        %v1417 = vsub.f32 %v983, %v1385
        %v1418 = vsub.f32 %v983, %v1386
        %v1419 = vsub.f32 %v983, %v1387
        %v1420 = vsub.f32 %v983, %v1388
        %v1421 = vsub.f32 %v983, %v1389
        %v1422 = vsub.f32 %v983, %v1390
        %v1423 = vsub.f32 %v983, %v1391
        %v1424 = vsub.f32 %v983, %v1392
        %v1425 = vsub.f32 %v983, %v1393
        %v1426 = vsub.f32 %v983, %v1394
        %v1427 = vsub.f32 %v983, %v1395
        %v1428 = vsub.f32 %v983, %v1396
        %v1429 = vsub.f32 %v983, %v1397
        %v1430 = vsub.f32 %v983, %v1398
        %v1431 = vsub.f32 %v983, %v1399
        %v1432 = vsub.f32 %v983, %v1400
        %v1433 = vsub.f32 %v983, %v1401
        %v1434 = vsub.f32 %v983, %v1402
        %v1435 = vsub.f32 %v983, %v1403
        %v1436 = vsub.f32 %v983, %v1404
        %v1437 = vsub.f32 %v983, %v1405
        %v1438 = vsub.f32 %v983, %v1406
        %v1439 = vsub.f32 %v983, %v1407
        %v1440 = vsub.f32 %v983, %v1408
        %v1441 = vsub.f32 %v983, %v1409
        %v1442 = vmin.f32 %v1410, 80.0
        %v1443 = vmin.f32 %v1411, 80.0
        %v1444 = vmin.f32 %v1412, 80.0
        %v1445 = vmin.f32 %v1413, 80.0
        %v1446 = vmin.f32 %v1414, 80.0
        %v1447 = vmin.f32 %v1415, 80.0
        %v1448 = vmin.f32 %v1416, 80.0
        %v1449 = vmin.f32 %v1417, 80.0
        %v1450 = vmin.f32 %v1418, 80.0
        %v1451 = vmin.f32 %v1419, 80.0
        %v1452 = vmin.f32 %v1420, 80.0
        %v1453 = vmin.f32 %v1421, 80.0
        %v1454 = vmin.f32 %v1422, 80.0
        %v1455 = vmin.f32 %v1423, 80.0
        %v1456 = vmin.f32 %v1424, 80.0
        %v1457 = vmin.f32 %v1425, 80.0
        %v1458 = vmin.f32 %v1426, 80.0
        %v1459 = vmin.f32 %v1427, 80.0
        %v1460 = vmin.f32 %v1428, 80.0
        %v1461 = vmin.f32 %v1429, 80.0
        %v1462 = vmin.f32 %v1430, 80.0
        %v1463 = vmin.f32 %v1431, 80.0
        %v1464 = vmin.f32 %v1432, 80.0
        %v1465 = vmin.f32 %v1433, 80.0
        %v1466 = vmin.f32 %v1434, 80.0
        %v1467 = vmin.f32 %v1435, 80.0
        %v1468 = vmin.f32 %v1436, 80.0
        %v1469 = vmin.f32 %v1437, 80.0
        %v1470 = vmin.f32 %v1438, 80.0
        %v1471 = vmin.f32 %v1439, 80.0
        %v1472 = vmin.f32 %v1440, 80.0
        %v1473 = vmin.f32 %v1441, 80.0
        %v1474 = vmul.f32 %v1442, 1.442695
        %v1475 = vpow.pop %v1474
        %v1476 = vmul.f32 %v1443, 1.442695
        %v1477 = vpow.pop %v1476
        %v1478 = vmul.f32 %v1444, 1.442695
        %v1479 = vpow.pop %v1478
        %v1480 = vmul.f32 %v1445, 1.442695
        %v1481 = vpow.pop %v1480
        %v1482 = vmul.f32 %v1446, 1.442695
        %v1483 = vpow.pop %v1482
        %v1484 = vmul.f32 %v1447, 1.442695
        %v1485 = vpow.pop %v1484
        %v1486 = vmul.f32 %v1448, 1.442695
        %v1487 = vpow.pop %v1486
        %v1488 = vmul.f32 %v1449, 1.442695
        %v1489 = vpow.pop %v1488
        %v1490 = vmul.f32 %v1450, 1.442695
        %v1491 = vpow.pop %v1490
        %v1492 = vmul.f32 %v1451, 1.442695
        %v1493 = vpow.pop %v1492
        %v1494 = vmul.f32 %v1452, 1.442695
        %v1495 = vpow.pop %v1494
        %v1496 = vmul.f32 %v1453, 1.442695
        %v1497 = vpow.pop %v1496
        %v1498 = vmul.f32 %v1454, 1.442695
        %v1499 = vpow.pop %v1498
        %v1500 = vmul.f32 %v1455, 1.442695
        %v1501 = vpow.pop %v1500
        %v1502 = vmul.f32 %v1456, 1.442695
        %v1503 = vpow.pop %v1502
        %v1504 = vmul.f32 %v1457, 1.442695
        %v1505 = vpow.pop %v1504
        %v1506 = vmul.f32 %v1458, 1.442695
        %v1507 = vpow.pop %v1506
        %v1508 = vmul.f32 %v1459, 1.442695
        %v1509 = vpow.pop %v1508
        %v1510 = vmul.f32 %v1460, 1.442695
        %v1511 = vpow.pop %v1510
        %v1512 = vmul.f32 %v1461, 1.442695
        %v1513 = vpow.pop %v1512
        %v1514 = vmul.f32 %v1462, 1.442695
        %v1515 = vpow.pop %v1514
        %v1516 = vmul.f32 %v1463, 1.442695
        %v1517 = vpow.pop %v1516
        %v1518 = vmul.f32 %v1464, 1.442695
        %v1519 = vpow.pop %v1518
        %v1520 = vmul.f32 %v1465, 1.442695
        %v1521 = vpow.pop %v1520
        %v1522 = vmul.f32 %v1466, 1.442695
        %v1523 = vpow.pop %v1522
        %v1524 = vmul.f32 %v1467, 1.442695
        %v1525 = vpow.pop %v1524
        %v1526 = vmul.f32 %v1468, 1.442695
        %v1527 = vpow.pop %v1526
        %v1528 = vmul.f32 %v1469, 1.442695
        %v1529 = vpow.pop %v1528
        %v1530 = vmul.f32 %v1470, 1.442695
        %v1531 = vpow.pop %v1530
        %v1532 = vmul.f32 %v1471, 1.442695
        %v1533 = vpow.pop %v1532
        %v1534 = vmul.f32 %v1472, 1.442695
        %v1535 = vpow.pop %v1534
        %v1536 = vmul.f32 %v1473, 1.442695
        %v1537 = vpow.pop %v1536
        %v1538 = vld [vmem:[#allocation3] sm:$0xff]
        %v1539 = vld [vmem:[#allocation3 + $0x8] sm:$0xff]
        %v1540 = vld [vmem:[#allocation3 + $0x10] sm:$0xff]
        %v1541 = vld [vmem:[#allocation3 + $0x18] sm:$0xff]
        %v1542 = vld [vmem:[#allocation3 + $0x20] sm:$0xff]
        %v1543 = vld [vmem:[#allocation3 + $0x28] sm:$0xff]
        %v1544 = vld [vmem:[#allocation3 + $0x30] sm:$0xff]
        %v1545 = vld [vmem:[#allocation3 + $0x38] sm:$0xff]
        %v1546 = vld [vmem:[#allocation3 + $0x40] sm:$0xff]
        %v1547 = vld [vmem:[#allocation3 + $0x48] sm:$0xff]
        %v1548 = vld [vmem:[#allocation3 + $0x50] sm:$0xff]
        %v1549 = vld [vmem:[#allocation3 + $0x58] sm:$0xff]
        %v1550 = vld [vmem:[#allocation3 + $0x60] sm:$0xff]
        %v1551 = vld [vmem:[#allocation3 + $0x68] sm:$0xff]
        %v1552 = vld [vmem:[#allocation3 + $0x70] sm:$0xff]
        %v1553 = vld [vmem:[#allocation3 + $0x78] sm:$0xff]
        %v1554 = vld [vmem:[#allocation3 + $0x80] sm:$0xff]
        %v1555 = vld [vmem:[#allocation3 + $0x88] sm:$0xff]
        %v1556 = vld [vmem:[#allocation3 + $0x90] sm:$0xff]
        %v1557 = vld [vmem:[#allocation3 + $0x98] sm:$0xff]
        %v1558 = vld [vmem:[#allocation3 + $0xa0] sm:$0xff]
        %v1559 = vld [vmem:[#allocation3 + $0xa8] sm:$0xff]
        %v1560 = vld [vmem:[#allocation3 + $0xb0] sm:$0xff]
        %v1561 = vld [vmem:[#allocation3 + $0xb8] sm:$0xff]
        %v1562 = vld [vmem:[#allocation3 + $0xc0] sm:$0xff]
        %v1563 = vld [vmem:[#allocation3 + $0xc8] sm:$0xff]
        %v1564 = vld [vmem:[#allocation3 + $0xd0] sm:$0xff]
        %v1565 = vld [vmem:[#allocation3 + $0xd8] sm:$0xff]
        %v1566 = vld [vmem:[#allocation3 + $0xe0] sm:$0xff]
        %v1567 = vld [vmem:[#allocation3 + $0xe8] sm:$0xff]
        %v1568 = vld [vmem:[#allocation3 + $0xf0] sm:$0xff]
        %v1569 = vld [vmem:[#allocation3 + $0xf8] sm:$0xff]
        %v1570 = vsub.f32 %v1346, %v1378
        %v1571 = vsub.f32 %v1347, %v1379
        %v1572 = vsub.f32 %v1348, %v1380
        %v1573 = vsub.f32 %v1349, %v1381
        %v1574 = vsub.f32 %v1350, %v1382
        %v1575 = vsub.f32 %v1351, %v1383
        %v1576 = vsub.f32 %v1352, %v1384
        %v1577 = vsub.f32 %v1353, %v1385
        %v1578 = vsub.f32 %v1354, %v1386
        %v1579 = vsub.f32 %v1355, %v1387
        %v1580 = vsub.f32 %v1356, %v1388
        %v1581 = vsub.f32 %v1357, %v1389
        %v1582 = vsub.f32 %v1358, %v1390
        %v1583 = vsub.f32 %v1359, %v1391
        %v1584 = vsub.f32 %v1360, %v1392
        %v1585 = vsub.f32 %v1361, %v1393
        %v1586 = vsub.f32 %v1362, %v1394
        %v1587 = vsub.f32 %v1363, %v1395
        %v1588 = vsub.f32 %v1364, %v1396
        %v1589 = vsub.f32 %v1365, %v1397
        %v1590 = vsub.f32 %v1366, %v1398
        %v1591 = vsub.f32 %v1367, %v1399
        %v1592 = vsub.f32 %v1368, %v1400
        %v1593 = vsub.f32 %v1369, %v1401
        %v1594 = vsub.f32 %v1370, %v1402
        %v1595 = vsub.f32 %v1371, %v1403
        %v1596 = vsub.f32 %v1372, %v1404
        %v1597 = vsub.f32 %v1373, %v1405
        %v1598 = vsub.f32 %v1374, %v1406
        %v1599 = vsub.f32 %v1375, %v1407
        %v1600 = vsub.f32 %v1376, %v1408
        %v1601 = vsub.f32 %v1377, %v1409
        %v1602 = vmul.f32 %v1570, 1.442695
        %v1603 = vpow.pop %v1602
        %v1604 = vmul.f32 %v1571, 1.442695
        %v1605 = vpow.pop %v1604
        %v1606 = vmul.f32 %v1572, 1.442695
        %v1607 = vpow.pop %v1606
        %v1608 = vmul.f32 %v1573, 1.442695
        %v1609 = vpow.pop %v1608
        %v1610 = vmul.f32 %v1574, 1.442695
        %v1611 = vpow.pop %v1610
        %v1612 = vmul.f32 %v1575, 1.442695
        %v1613 = vpow.pop %v1612
        %v1614 = vmul.f32 %v1576, 1.442695
        %v1615 = vpow.pop %v1614
        %v1616 = vmul.f32 %v1577, 1.442695
        %v1617 = vpow.pop %v1616
        %v1618 = vmul.f32 %v1578, 1.442695
        %v1619 = vpow.pop %v1618
        %v1620 = vmul.f32 %v1579, 1.442695
        %v1621 = vpow.pop %v1620
        %v1622 = vmul.f32 %v1580, 1.442695
        %v1623 = vpow.pop %v1622
        %v1624 = vmul.f32 %v1581, 1.442695
        %v1625 = vpow.pop %v1624
        %v1626 = vmul.f32 %v1582, 1.442695
        %v1627 = vpow.pop %v1626
        %v1628 = vmul.f32 %v1583, 1.442695
        %v1629 = vpow.pop %v1628
        %v1630 = vmul.f32 %v1584, 1.442695
        %v1631 = vpow.pop %v1630
        %v1632 = vmul.f32 %v1585, 1.442695
        %v1633 = vpow.pop %v1632
        %v1634 = vmul.f32 %v1586, 1.442695
        %v1635 = vpow.pop %v1634
        %v1636 = vmul.f32 %v1587, 1.442695
        %v1637 = vpow.pop %v1636
        %v1638 = vmul.f32 %v1588, 1.442695
        %v1639 = vpow.pop %v1638
        %v1640 = vmul.f32 %v1589, 1.442695
        %v1641 = vpow.pop %v1640
        %v1642 = vmul.f32 %v1590, 1.442695
        %v1643 = vpow.pop %v1642
        %v1644 = vmul.f32 %v1591, 1.442695
        %v1645 = vpow.pop %v1644
        %v1646 = vmul.f32 %v1592, 1.442695
        %v1647 = vpow.pop %v1646
        %v1648 = vmul.f32 %v1593, 1.442695
        %v1649 = vpow.pop %v1648
        %v1650 = vmul.f32 %v1594, 1.442695
        %v1651 = vpow.pop %v1650
        %v1652 = vmul.f32 %v1595, 1.442695
        %v1653 = vpow.pop %v1652
        %v1654 = vmul.f32 %v1596, 1.442695
        %v1655 = vpow.pop %v1654
        %v1656 = vmul.f32 %v1597, 1.442695
        %v1657 = vpow.pop %v1656
        %v1658 = vmul.f32 %v1598, 1.442695
        %v1659 = vpow.pop %v1658
        %v1660 = vmul.f32 %v1599, 1.442695
        %v1661 = vpow.pop %v1660
        %v1662 = vmul.f32 %v1600, 1.442695
        %v1663 = vpow.pop %v1662
        %v1664 = vmul.f32 %v1601, 1.442695
        %v1665 = vpow.pop %v1664
        %v1666 = vmul.f32 %v1538, %v1603
        %v1667 = vmul.f32 %v1539, %v1605
        %v1668 = vmul.f32 %v1540, %v1607
        %v1669 = vmul.f32 %v1541, %v1609
        %v1670 = vmul.f32 %v1542, %v1611
        %v1671 = vmul.f32 %v1543, %v1613
        %v1672 = vmul.f32 %v1544, %v1615
        %v1673 = vmul.f32 %v1545, %v1617
        %v1674 = vmul.f32 %v1546, %v1619
        %v1675 = vmul.f32 %v1547, %v1621
        %v1676 = vmul.f32 %v1548, %v1623
        %v1677 = vmul.f32 %v1549, %v1625
        %v1678 = vmul.f32 %v1550, %v1627
        %v1679 = vmul.f32 %v1551, %v1629
        %v1680 = vmul.f32 %v1552, %v1631
        %v1681 = vmul.f32 %v1553, %v1633
        %v1682 = vmul.f32 %v1554, %v1635
        %v1683 = vmul.f32 %v1555, %v1637
        %v1684 = vmul.f32 %v1556, %v1639
        %v1685 = vmul.f32 %v1557, %v1641
        %v1686 = vmul.f32 %v1558, %v1643
        %v1687 = vmul.f32 %v1559, %v1645
        %v1688 = vmul.f32 %v1560, %v1647
        %v1689 = vmul.f32 %v1561, %v1649
        %v1690 = vmul.f32 %v1562, %v1651
        %v1691 = vmul.f32 %v1563, %v1653
        %v1692 = vmul.f32 %v1564, %v1655
        %v1693 = vmul.f32 %v1565, %v1657
        %v1694 = vmul.f32 %v1566, %v1659
        %v1695 = vmul.f32 %v1567, %v1661
        %v1696 = vmul.f32 %v1568, %v1663
        %v1697 = vmul.f32 %v1569, %v1665
        %v1698 = vmul.f32 %v1178, %v1475
        %v1699 = vmul.f32 %v1181, %v1477
        %v1700 = vmul.f32 %v1184, %v1479
        %v1701 = vmul.f32 %v1187, %v1481
        %v1702 = vmul.f32 %v1190, %v1483
        %v1703 = vmul.f32 %v1193, %v1485
        %v1704 = vmul.f32 %v1196, %v1487
        %v1705 = vmul.f32 %v1199, %v1489
        %v1706 = vmul.f32 %v1202, %v1491
        %v1707 = vmul.f32 %v1205, %v1493
        %v1708 = vmul.f32 %v1208, %v1495
        %v1709 = vmul.f32 %v1211, %v1497
        %v1710 = vmul.f32 %v1214, %v1499
        %v1711 = vmul.f32 %v1217, %v1501
        %v1712 = vmul.f32 %v1220, %v1503
        %v1713 = vmul.f32 %v1223, %v1505
        %v1714 = vmul.f32 %v1226, %v1507
        %v1715 = vmul.f32 %v1229, %v1509
        %v1716 = vmul.f32 %v1232, %v1511
        %v1717 = vmul.f32 %v1235, %v1513
        %v1718 = vmul.f32 %v1238, %v1515
        %v1719 = vmul.f32 %v1241, %v1517
        %v1720 = vmul.f32 %v1244, %v1519
        %v1721 = vmul.f32 %v1247, %v1521
        %v1722 = vmul.f32 %v1250, %v1523
        %v1723 = vmul.f32 %v1253, %v1525
        %v1724 = vmul.f32 %v1256, %v1527
        %v1725 = vmul.f32 %v1259, %v1529
        %v1726 = vmul.f32 %v1262, %v1531
        %v1727 = vmul.f32 %v1265, %v1533
        %v1728 = vmul.f32 %v1268, %v1535
        %v1729 = vmul.f32 %v1271, %v1537
        %v1730 = vadd.f32 %v1666, %v1698
        %v1731 = vadd.f32 %v1667, %v1699
        %v1732 = vadd.f32 %v1668, %v1700
        %v1733 = vadd.f32 %v1669, %v1701
        %v1734 = vadd.f32 %v1670, %v1702
        %v1735 = vadd.f32 %v1671, %v1703
        %v1736 = vadd.f32 %v1672, %v1704
        %v1737 = vadd.f32 %v1673, %v1705
        %v1738 = vadd.f32 %v1674, %v1706
        %v1739 = vadd.f32 %v1675, %v1707
        %v1740 = vadd.f32 %v1676, %v1708
        %v1741 = vadd.f32 %v1677, %v1709
        %v1742 = vadd.f32 %v1678, %v1710
        %v1743 = vadd.f32 %v1679, %v1711
        %v1744 = vadd.f32 %v1680, %v1712
        %v1745 = vadd.f32 %v1681, %v1713
        %v1746 = vadd.f32 %v1682, %v1714
        %v1747 = vadd.f32 %v1683, %v1715
        %v1748 = vadd.f32 %v1684, %v1716
        %v1749 = vadd.f32 %v1685, %v1717
        %v1750 = vadd.f32 %v1686, %v1718
        %v1751 = vadd.f32 %v1687, %v1719
        %v1752 = vadd.f32 %v1688, %v1720
        %v1753 = vadd.f32 %v1689, %v1721
        %v1754 = vadd.f32 %v1690, %v1722
        %v1755 = vadd.f32 %v1691, %v1723
        %v1756 = vadd.f32 %v1692, %v1724
        %v1757 = vadd.f32 %v1693, %v1725
        %v1758 = vadd.f32 %v1694, %v1726
        %v1759 = vadd.f32 %v1695, %v1727
        %v1760 = vadd.f32 %v1696, %v1728
        %v1761 = vadd.f32 %v1697, %v1729
        %vm1762 = vcmask 7168
        %1763 = vst.msk [vmem:[#allocation3] sm:$0xff] %vm1762, %v1730
        %1764 = vst.msk [vmem:[#allocation3 + $0x8] sm:$0xff] %vm1762, %v1731
        %1765 = vst.msk [vmem:[#allocation3 + $0x10] sm:$0xff] %vm1762, %v1732
        %1766 = vst.msk [vmem:[#allocation3 + $0x18] sm:$0xff] %vm1762, %v1733
        %1767 = vst.msk [vmem:[#allocation3 + $0x20] sm:$0xff] %vm1762, %v1734
        %1768 = vst.msk [vmem:[#allocation3 + $0x28] sm:$0xff] %vm1762, %v1735
        %1769 = vst.msk [vmem:[#allocation3 + $0x30] sm:$0xff] %vm1762, %v1736
        %1770 = vst.msk [vmem:[#allocation3 + $0x38] sm:$0xff] %vm1762, %v1737
        %1771 = vst.msk [vmem:[#allocation3 + $0x40] sm:$0xff] %vm1762, %v1738
        %1772 = vst.msk [vmem:[#allocation3 + $0x48] sm:$0xff] %vm1762, %v1739
        %1773 = vst.msk [vmem:[#allocation3 + $0x50] sm:$0xff] %vm1762, %v1740
        %1774 = vst.msk [vmem:[#allocation3 + $0x58] sm:$0xff] %vm1762, %v1741
        %1775 = vst.msk [vmem:[#allocation3 + $0x60] sm:$0xff] %vm1762, %v1742
        %1776 = vst.msk [vmem:[#allocation3 + $0x68] sm:$0xff] %vm1762, %v1743
        %1777 = vst.msk [vmem:[#allocation3 + $0x70] sm:$0xff] %vm1762, %v1744
        %1778 = vst.msk [vmem:[#allocation3 + $0x78] sm:$0xff] %vm1762, %v1745
        %1779 = vst.msk [vmem:[#allocation3 + $0x80] sm:$0xff] %vm1762, %v1746
        %1780 = vst.msk [vmem:[#allocation3 + $0x88] sm:$0xff] %vm1762, %v1747
        %1781 = vst.msk [vmem:[#allocation3 + $0x90] sm:$0xff] %vm1762, %v1748
        %1782 = vst.msk [vmem:[#allocation3 + $0x98] sm:$0xff] %vm1762, %v1749
        %1783 = vst.msk [vmem:[#allocation3 + $0xa0] sm:$0xff] %vm1762, %v1750
        %1784 = vst.msk [vmem:[#allocation3 + $0xa8] sm:$0xff] %vm1762, %v1751
        %1785 = vst.msk [vmem:[#allocation3 + $0xb0] sm:$0xff] %vm1762, %v1752
        %1786 = vst.msk [vmem:[#allocation3 + $0xb8] sm:$0xff] %vm1762, %v1753
        %1787 = vst.msk [vmem:[#allocation3 + $0xc0] sm:$0xff] %vm1762, %v1754
        %1788 = vst.msk [vmem:[#allocation3 + $0xc8] sm:$0xff] %vm1762, %v1755
        %1789 = vst.msk [vmem:[#allocation3 + $0xd0] sm:$0xff] %vm1762, %v1756
        %1790 = vst.msk [vmem:[#allocation3 + $0xd8] sm:$0xff] %vm1762, %v1757
        %1791 = vst.msk [vmem:[#allocation3 + $0xe0] sm:$0xff] %vm1762, %v1758
        %1792 = vst.msk [vmem:[#allocation3 + $0xe8] sm:$0xff] %vm1762, %v1759
        %1793 = vst.msk [vmem:[#allocation3 + $0xf0] sm:$0xff] %vm1762, %v1760
        %1794 = vst.msk [vmem:[#allocation3 + $0xf8] sm:$0xff] %vm1762, %v1761
        %1795 = vst.msk [vmem:[#allocation2] sm:$0xff] %vm1762, %v1378
        %1796 = vst.msk [vmem:[#allocation2 + $0x8] sm:$0xff] %vm1762, %v1379
        %1797 = vst.msk [vmem:[#allocation2 + $0x10] sm:$0xff] %vm1762, %v1380
        %1798 = vst.msk [vmem:[#allocation2 + $0x18] sm:$0xff] %vm1762, %v1381
        %1799 = vst.msk [vmem:[#allocation2 + $0x20] sm:$0xff] %vm1762, %v1382
        %1800 = vst.msk [vmem:[#allocation2 + $0x28] sm:$0xff] %vm1762, %v1383
        %1801 = vst.msk [vmem:[#allocation2 + $0x30] sm:$0xff] %vm1762, %v1384
        %1802 = vst.msk [vmem:[#allocation2 + $0x38] sm:$0xff] %vm1762, %v1385
        %1803 = vst.msk [vmem:[#allocation2 + $0x40] sm:$0xff] %vm1762, %v1386
        %1804 = vst.msk [vmem:[#allocation2 + $0x48] sm:$0xff] %vm1762, %v1387
        %1805 = vst.msk [vmem:[#allocation2 + $0x50] sm:$0xff] %vm1762, %v1388
        %1806 = vst.msk [vmem:[#allocation2 + $0x58] sm:$0xff] %vm1762, %v1389
        %1807 = vst.msk [vmem:[#allocation2 + $0x60] sm:$0xff] %vm1762, %v1390
        %1808 = vst.msk [vmem:[#allocation2 + $0x68] sm:$0xff] %vm1762, %v1391
        %1809 = vst.msk [vmem:[#allocation2 + $0x70] sm:$0xff] %vm1762, %v1392
        %1810 = vst.msk [vmem:[#allocation2 + $0x78] sm:$0xff] %vm1762, %v1393
        %1811 = vst.msk [vmem:[#allocation2 + $0x80] sm:$0xff] %vm1762, %v1394
        %1812 = vst.msk [vmem:[#allocation2 + $0x88] sm:$0xff] %vm1762, %v1395
        %1813 = vst.msk [vmem:[#allocation2 + $0x90] sm:$0xff] %vm1762, %v1396
        %1814 = vst.msk [vmem:[#allocation2 + $0x98] sm:$0xff] %vm1762, %v1397
        %1815 = vst.msk [vmem:[#allocation2 + $0xa0] sm:$0xff] %vm1762, %v1398
        %1816 = vst.msk [vmem:[#allocation2 + $0xa8] sm:$0xff] %vm1762, %v1399
        %1817 = vst.msk [vmem:[#allocation2 + $0xb0] sm:$0xff] %vm1762, %v1400
        %1818 = vst.msk [vmem:[#allocation2 + $0xb8] sm:$0xff] %vm1762, %v1401
        %1819 = vst.msk [vmem:[#allocation2 + $0xc0] sm:$0xff] %vm1762, %v1402
        %1820 = vst.msk [vmem:[#allocation2 + $0xc8] sm:$0xff] %vm1762, %v1403
        %1821 = vst.msk [vmem:[#allocation2 + $0xd0] sm:$0xff] %vm1762, %v1404
        %1822 = vst.msk [vmem:[#allocation2 + $0xd8] sm:$0xff] %vm1762, %v1405
        %1823 = vst.msk [vmem:[#allocation2 + $0xe0] sm:$0xff] %vm1762, %v1406
        %1824 = vst.msk [vmem:[#allocation2 + $0xe8] sm:$0xff] %vm1762, %v1407
        %1825 = vst.msk [vmem:[#allocation2 + $0xf0] sm:$0xff] %vm1762, %v1408
        %1826 = vst.msk [vmem:[#allocation2 + $0xf8] sm:$0xff] %vm1762, %v1409
        %s1827 = sshra.s32 %s483, 7
        %s1828 = sand.u32 %s483, 127
        %s1829 = scalar_lea.vmem %s294, %s1827 [#allocation12]
        %v1830 = vld [vmem:[%s1829] sm:$0x3]
        %s1831 = scalar_lea.vmem %s301, %s1827 [#allocation14]
        %v1832 = vld [vmem:[%s1831] sm:$0x3]
        %v1835 = vrot.slane %v944, 7
        %vm1836 = vcmask 1040384
        %v1837 = vsel %vm1836, %v907, %v1835
        %v1839 = vmax.f32 %v1830, %v1837
        %v1840 = vsub.f32 %v983, %v1839
        %v1841 = vmin.f32 %v1840, 80.0
        %v1842 = vmul.f32 %v1841, 1.442695
        %v1843 = vpow.pop %v1842
        %v1844 = vsub.f32 %v1830, %v1839
        %v1845 = vmul.f32 %v1844, 1.442695
        %v1846 = vpow.pop %v1845
        %v1847 = vmul.f32 %v1832, %v1846
        %v1849 = vperm.slane %v1843, 0
        %v1850 = vperm.slane %v1843, 1
        %v1853 = vmul.f32 %v1308, %v1849
        %v1854 = vmul.f32 %v1345, %v1850
        %v1857 = vrot.slane %v1854, 7
        %v1858 = vsel %vm1836, %v1853, %v1857
        %v1860 = vadd.f32 %v1847, %v1858
        %v1861 = vlaneseq
        %vm1862 = vcmp.ge.s32.totalorder %v1861, 0
        %vm1863 = vcmp.lt.s32.totalorder %v1861, 256
        %vm1864 = vmand %vm1862, %vm1863
        %1865 = vst.msk [vmem:[%s1831] sm:$0x3] %vm1864, %v1860
        %1866 = vst.msk [vmem:[%s1829] sm:$0x3] %vm1864, %v1839
        %p1867 = scmp.eq.s32.totalorder %s35, 1
        // Predicated region
        $region49: #{tpu_custom_call.1} parent=31 // pred_check
          %p1868 = pneg %p1867
        $region50: #{tpu_custom_call.1} parent=31 // pred_check_branch
          %1870 = sbr.rel (%p1868) target = $region52
        $region51: #{tpu_custom_call.1} parent=31 // pred_region
          %v1871 = vld [vmem:[#allocation2] sm:$0xff]
          %v1872 = vld [vmem:[#allocation2 + $0x8] sm:$0xff]
          %v1873 = vld [vmem:[#allocation2 + $0x10] sm:$0xff]
          %v1874 = vld [vmem:[#allocation2 + $0x18] sm:$0xff]
          %v1875 = vld [vmem:[#allocation2 + $0x20] sm:$0xff]
          %v1876 = vld [vmem:[#allocation2 + $0x28] sm:$0xff]
          %v1877 = vld [vmem:[#allocation2 + $0x30] sm:$0xff]
          %v1878 = vld [vmem:[#allocation2 + $0x38] sm:$0xff]
          %v1879 = vld [vmem:[#allocation2 + $0x40] sm:$0xff]
          %v1880 = vld [vmem:[#allocation2 + $0x48] sm:$0xff]
          %v1881 = vld [vmem:[#allocation2 + $0x50] sm:$0xff]
          %v1882 = vld [vmem:[#allocation2 + $0x58] sm:$0xff]
          %v1883 = vld [vmem:[#allocation2 + $0x60] sm:$0xff]
          %v1884 = vld [vmem:[#allocation2 + $0x68] sm:$0xff]
          %v1885 = vld [vmem:[#allocation2 + $0x70] sm:$0xff]
          %v1886 = vld [vmem:[#allocation2 + $0x78] sm:$0xff]
          %v1887 = vld [vmem:[#allocation2 + $0x80] sm:$0xff]
          %v1888 = vld [vmem:[#allocation2 + $0x88] sm:$0xff]
          %v1889 = vld [vmem:[#allocation2 + $0x90] sm:$0xff]
          %v1890 = vld [vmem:[#allocation2 + $0x98] sm:$0xff]
          %v1891 = vld [vmem:[#allocation2 + $0xa0] sm:$0xff]
          %v1892 = vld [vmem:[#allocation2 + $0xa8] sm:$0xff]
          %v1893 = vld [vmem:[#allocation2 + $0xb0] sm:$0xff]
          %v1894 = vld [vmem:[#allocation2 + $0xb8] sm:$0xff]
          %v1895 = vld [vmem:[#allocation2 + $0xc0] sm:$0xff]
          %v1896 = vld [vmem:[#allocation2 + $0xc8] sm:$0xff]
          %v1897 = vld [vmem:[#allocation2 + $0xd0] sm:$0xff]
          %v1898 = vld [vmem:[#allocation2 + $0xd8] sm:$0xff]
          %v1899 = vld [vmem:[#allocation2 + $0xe0] sm:$0xff]
          %v1900 = vld [vmem:[#allocation2 + $0xe8] sm:$0xff]
          %v1901 = vld [vmem:[#allocation2 + $0xf0] sm:$0xff]
          %v1902 = vld [vmem:[#allocation2 + $0xf8] sm:$0xff]
          %v1903 = vld [vmem:[#allocation3] sm:$0xff]
          %v1904 = vld [vmem:[#allocation3 + $0x8] sm:$0xff]
          %v1905 = vld [vmem:[#allocation3 + $0x10] sm:$0xff]
          %v1906 = vld [vmem:[#allocation3 + $0x18] sm:$0xff]
          %v1907 = vld [vmem:[#allocation3 + $0x20] sm:$0xff]
          %v1908 = vld [vmem:[#allocation3 + $0x28] sm:$0xff]
          %v1909 = vld [vmem:[#allocation3 + $0x30] sm:$0xff]
          %v1910 = vld [vmem:[#allocation3 + $0x38] sm:$0xff]
          %v1911 = vld [vmem:[#allocation3 + $0x40] sm:$0xff]
          %v1912 = vld [vmem:[#allocation3 + $0x48] sm:$0xff]
          %v1913 = vld [vmem:[#allocation3 + $0x50] sm:$0xff]
          %v1914 = vld [vmem:[#allocation3 + $0x58] sm:$0xff]
          %v1915 = vld [vmem:[#allocation3 + $0x60] sm:$0xff]
          %v1916 = vld [vmem:[#allocation3 + $0x68] sm:$0xff]
          %v1917 = vld [vmem:[#allocation3 + $0x70] sm:$0xff]
          %v1918 = vld [vmem:[#allocation3 + $0x78] sm:$0xff]
          %v1919 = vld [vmem:[#allocation3 + $0x80] sm:$0xff]
          %v1920 = vld [vmem:[#allocation3 + $0x88] sm:$0xff]
          %v1921 = vld [vmem:[#allocation3 + $0x90] sm:$0xff]
          %v1922 = vld [vmem:[#allocation3 + $0x98] sm:$0xff]
          %v1923 = vld [vmem:[#allocation3 + $0xa0] sm:$0xff]
          %v1924 = vld [vmem:[#allocation3 + $0xa8] sm:$0xff]
          %v1925 = vld [vmem:[#allocation3 + $0xb0] sm:$0xff]
          %v1926 = vld [vmem:[#allocation3 + $0xb8] sm:$0xff]
          %v1927 = vld [vmem:[#allocation3 + $0xc0] sm:$0xff]
          %v1928 = vld [vmem:[#allocation3 + $0xc8] sm:$0xff]
          %v1929 = vld [vmem:[#allocation3 + $0xd0] sm:$0xff]
          %v1930 = vld [vmem:[#allocation3 + $0xd8] sm:$0xff]
          %v1931 = vld [vmem:[#allocation3 + $0xe0] sm:$0xff]
          %v1932 = vld [vmem:[#allocation3 + $0xe8] sm:$0xff]
          %v1933 = vld [vmem:[#allocation3 + $0xf0] sm:$0xff]
          %v1934 = vld [vmem:[#allocation3 + $0xf8] sm:$0xff]
          %v1935 = vlog2.pop %v1903
          %v1936 = vmul.f32 %v1935, 0.6931472
          %v1937 = vlog2.pop %v1904
          %v1938 = vmul.f32 %v1937, 0.6931472
          %v1939 = vlog2.pop %v1905
          %v1940 = vmul.f32 %v1939, 0.6931472
          %v1941 = vlog2.pop %v1906
          %v1942 = vmul.f32 %v1941, 0.6931472
          %v1943 = vlog2.pop %v1907
          %v1944 = vmul.f32 %v1943, 0.6931472
          %v1945 = vlog2.pop %v1908
          %v1946 = vmul.f32 %v1945, 0.6931472
          %v1947 = vlog2.pop %v1909
          %v1948 = vmul.f32 %v1947, 0.6931472
          %v1949 = vlog2.pop %v1910
          %v1950 = vmul.f32 %v1949, 0.6931472
          %v1951 = vlog2.pop %v1911
          %v1952 = vmul.f32 %v1951, 0.6931472
          %v1953 = vlog2.pop %v1912
          %v1954 = vmul.f32 %v1953, 0.6931472
          %v1955 = vlog2.pop %v1913
          %v1956 = vmul.f32 %v1955, 0.6931472
          %v1957 = vlog2.pop %v1914
          %v1958 = vmul.f32 %v1957, 0.6931472
          %v1959 = vlog2.pop %v1915
          %v1960 = vmul.f32 %v1959, 0.6931472
          %v1961 = vlog2.pop %v1916
          %v1962 = vmul.f32 %v1961, 0.6931472
          %v1963 = vlog2.pop %v1917
          %v1964 = vmul.f32 %v1963, 0.6931472
          %v1965 = vlog2.pop %v1918
          %v1966 = vmul.f32 %v1965, 0.6931472
          %v1967 = vlog2.pop %v1919
          %v1968 = vmul.f32 %v1967, 0.6931472
          %v1969 = vlog2.pop %v1920
          %v1970 = vmul.f32 %v1969, 0.6931472
          %v1971 = vlog2.pop %v1921
          %v1972 = vmul.f32 %v1971, 0.6931472
          %v1973 = vlog2.pop %v1922
          %v1974 = vmul.f32 %v1973, 0.6931472
          %v1975 = vlog2.pop %v1923
          %v1976 = vmul.f32 %v1975, 0.6931472
          %v1977 = vlog2.pop %v1924
          %v1978 = vmul.f32 %v1977, 0.6931472
          %v1979 = vlog2.pop %v1925
          %v1980 = vmul.f32 %v1979, 0.6931472
          %v1981 = vlog2.pop %v1926
          %v1982 = vmul.f32 %v1981, 0.6931472
          %v1983 = vlog2.pop %v1927
          %v1984 = vmul.f32 %v1983, 0.6931472
          %v1985 = vlog2.pop %v1928
          %v1986 = vmul.f32 %v1985, 0.6931472
          %v1987 = vlog2.pop %v1929
          %v1988 = vmul.f32 %v1987, 0.6931472
          %v1989 = vlog2.pop %v1930
          %v1990 = vmul.f32 %v1989, 0.6931472
          %v1991 = vlog2.pop %v1931
          %v1992 = vmul.f32 %v1991, 0.6931472
          %v1993 = vlog2.pop %v1932
          %v1994 = vmul.f32 %v1993, 0.6931472
          %v1995 = vlog2.pop %v1933
          %v1996 = vmul.f32 %v1995, 0.6931472
          %v1997 = vlog2.pop %v1934
          %v1998 = vmul.f32 %v1997, 0.6931472
          %v1999 = vadd.f32 %v1871, %v1936
          %v2000 = vadd.f32 %v1872, %v1938
          %v2001 = vadd.f32 %v1873, %v1940
          %v2002 = vadd.f32 %v1874, %v1942
          %v2003 = vadd.f32 %v1875, %v1944
          %v2004 = vadd.f32 %v1876, %v1946
          %v2005 = vadd.f32 %v1877, %v1948
          %v2006 = vadd.f32 %v1878, %v1950
          %v2007 = vadd.f32 %v1879, %v1952
          %v2008 = vadd.f32 %v1880, %v1954
          %v2009 = vadd.f32 %v1881, %v1956
          %v2010 = vadd.f32 %v1882, %v1958
          %v2011 = vadd.f32 %v1883, %v1960
          %v2012 = vadd.f32 %v1884, %v1962
          %v2013 = vadd.f32 %v1885, %v1964
          %v2014 = vadd.f32 %v1886, %v1966
          %v2015 = vadd.f32 %v1887, %v1968
          %v2016 = vadd.f32 %v1888, %v1970
          %v2017 = vadd.f32 %v1889, %v1972
          %v2018 = vadd.f32 %v1890, %v1974
          %v2019 = vadd.f32 %v1891, %v1976
          %v2020 = vadd.f32 %v1892, %v1978
          %v2021 = vadd.f32 %v1893, %v1980
          %v2022 = vadd.f32 %v1894, %v1982
          %v2023 = vadd.f32 %v1895, %v1984
          %v2024 = vadd.f32 %v1896, %v1986
          %v2025 = vadd.f32 %v1897, %v1988
          %v2026 = vadd.f32 %v1898, %v1990
          %v2027 = vadd.f32 %v1899, %v1992
          %v2028 = vadd.f32 %v1900, %v1994
          %v2029 = vadd.f32 %v1901, %v1996
          %v2030 = vadd.f32 %v1902, %v1998
          %v2031 = vld [vmem:[%s287] sm:$0x1]
          %v2032 = vsel %vm1762, %v1999, 0.0
          %v2033 = vsel %vm1762, %v2000, 0.0
          %v2034 = vadd.f32 %v2032, %v2033
          %v2035 = vsel %vm1762, %v2001, 0.0
          %v2036 = vadd.f32 %v2034, %v2035
          %v2037 = vsel %vm1762, %v2002, 0.0
          %v2038 = vadd.f32 %v2036, %v2037
          %v2039 = vsel %vm1762, %v2003, 0.0
          %v2040 = vadd.f32 %v2038, %v2039
          %v2041 = vsel %vm1762, %v2004, 0.0
          %v2042 = vadd.f32 %v2040, %v2041
          %v2043 = vsel %vm1762, %v2005, 0.0
          %v2044 = vadd.f32 %v2042, %v2043
          %v2045 = vsel %vm1762, %v2006, 0.0
          %v2046 = vadd.f32 %v2044, %v2045
          %v2047 = vsel %vm1762, %v2007, 0.0
          %v2048 = vadd.f32 %v2046, %v2047
          %v2049 = vsel %vm1762, %v2008, 0.0
          %v2050 = vadd.f32 %v2048, %v2049
          %v2051 = vsel %vm1762, %v2009, 0.0
          %v2052 = vadd.f32 %v2050, %v2051
          %v2053 = vsel %vm1762, %v2010, 0.0
          %v2054 = vadd.f32 %v2052, %v2053
          %v2055 = vsel %vm1762, %v2011, 0.0
          %v2056 = vadd.f32 %v2054, %v2055
          %v2057 = vsel %vm1762, %v2012, 0.0
          %v2058 = vadd.f32 %v2056, %v2057
          %v2059 = vsel %vm1762, %v2013, 0.0
          %v2060 = vadd.f32 %v2058, %v2059
          %v2061 = vsel %vm1762, %v2014, 0.0
          %v2062 = vadd.f32 %v2060, %v2061
          %v2063 = vsel %vm1762, %v2015, 0.0
          %v2064 = vadd.f32 %v2062, %v2063
          %v2065 = vsel %vm1762, %v2016, 0.0
          %v2066 = vadd.f32 %v2064, %v2065
          %v2067 = vsel %vm1762, %v2017, 0.0
          %v2068 = vadd.f32 %v2066, %v2067
          %v2069 = vsel %vm1762, %v2018, 0.0
          %v2070 = vadd.f32 %v2068, %v2069
          %v2071 = vsel %vm1762, %v2019, 0.0
          %v2072 = vadd.f32 %v2070, %v2071
          %v2073 = vsel %vm1762, %v2020, 0.0
          %v2074 = vadd.f32 %v2072, %v2073
          %v2075 = vsel %vm1762, %v2021, 0.0
          %v2076 = vadd.f32 %v2074, %v2075
          %v2077 = vsel %vm1762, %v2022, 0.0
          %v2078 = vadd.f32 %v2076, %v2077
          %v2079 = vsel %vm1762, %v2023, 0.0
          %v2080 = vadd.f32 %v2078, %v2079
          %v2081 = vsel %vm1762, %v2024, 0.0
          %v2082 = vadd.f32 %v2080, %v2081
          %v2083 = vsel %vm1762, %v2025, 0.0
          %v2084 = vadd.f32 %v2082, %v2083
          %v2085 = vsel %vm1762, %v2026, 0.0
          %v2086 = vadd.f32 %v2084, %v2085
          %v2087 = vsel %vm1762, %v2027, 0.0
          %v2088 = vadd.f32 %v2086, %v2087
          %v2089 = vsel %vm1762, %v2028, 0.0
          %v2090 = vadd.f32 %v2088, %v2089
          %v2091 = vsel %vm1762, %v2029, 0.0
          %v2092 = vadd.f32 %v2090, %v2091
          %v2093 = vsel %vm1762, %v2030, 0.0
          %v2094 = vadd.f32 %v2092, %v2093
          %2095 = vadd.xlane.f32.xlu0 %v2094
          %v2096 = vpop.xlane.xlu0 %2095
          %v2097 = vrot.slane %v2096, 4
          %v2098 = vadd.f32 %v2096, %v2097
          %v2099 = vrot.slane %v2098, 2
          %v2100 = vadd.f32 %v2098, %v2099
          %v2101 = vrot.slane %v2100, 1
          %v2102 = vadd.f32 %v2100, %v2101
          %s2103 = vtos %v2102
          %v2104 = vstv %s2103
          %v2105 = vadd.f32 %v2031, %v2104
          %2106 = vst [vmem:[%s287] sm:$0x1] %v2105
        $region52: #{tpu_custom_call.1} parent=31 // pred_fallthru
          _
        %s2107 = sand.u32 %s125, 1
        %s2108 = scalar_lea.sflag [#allocation8], %s2107
        %s2109 = sand.u32 %s125, 1
        %s2110 = scalar_lea.vmem [#allocation11], %s2109
        %s2111 = sand.u32 %s28, 1
        %s2112 = scalar_lea.sflag [#allocation13], %s2111
        %s2113 = sand.u32 %s151, 1
        %s2114 = smul.addr %s2113, 4
        %s2115 = scalar_lea.vmem [#allocation12], %s2114
        %s2116 = sand.u32 %s28, 1
        %s2117 = scalar_lea.sflag [#allocation13], %s2116
        %s2118 = sand.u32 %s177, 1
        %s2119 = smul.addr %s2118, 4
        %s2120 = scalar_lea.vmem [#allocation14], %s2119
        // Predicated region
        $region53: #{tpu_custom_call.1} parent=31 // pred_check
          %p2121 = pneg %p135
        $region54: #{tpu_custom_call.1} parent=31 // pred_check_branch
          %2123 = sbr.rel (%p2121) target = $region56
        $region55: #{tpu_custom_call.1} parent=31 // pred_region
          %2125 = vsyncadd %s2108, 0
          %s2126 = scalar_lea.hbm %s3, %s33
          %s2128 = sshll.u32 %s2110, 4
          %s2129 = int_to_ptr.vmem [resolvable:$true] %s2128
          %s2130 = sshll.u32 %s2126, 4
          %s2131 = int_to_ptr.hbm [resolvable:$true] %s2130
          %2133 = dma.vmem_to_hbm [thread:$0]  %s2129, 16, %s2131, %s2108
        $region56: #{tpu_custom_call.1} parent=31 // pred_fallthru
          _
        // Predicated region
        $region57: #{tpu_custom_call.1} parent=31 // pred_check
          %p2134 = pneg %p161
        $region58: #{tpu_custom_call.1} parent=31 // pred_check_branch
          %2136 = sbr.rel (%p2134) target = $region60
        $region59: #{tpu_custom_call.1} parent=31 // pred_region
          %2138 = vsyncadd %s2112, 0
          %s2139 = smul.addr %s33, 4
          %s2140 = scalar_lea.hbm %s4, %s2139
          %s2142 = sshll.u32 %s2115, 4
          %s2143 = int_to_ptr.vmem [resolvable:$true] %s2142
          %s2144 = sshll.u32 %s2140, 4
          %s2145 = int_to_ptr.hbm [resolvable:$true] %s2144
          %2147 = dma.vmem_to_hbm [thread:$0]  %s2143, 64, %s2145, %s2112
        $region60: #{tpu_custom_call.1} parent=31 // pred_fallthru
          _
        // Predicated region
        $region61: #{tpu_custom_call.1} parent=31 // pred_check
          %p2148 = pneg %p187
        $region62: #{tpu_custom_call.1} parent=31 // pred_check_branch
          %2150 = sbr.rel (%p2148) target = $region64
        $region63: #{tpu_custom_call.1} parent=31 // pred_region
          %2152 = vsyncadd %s2117, 0
          %s2153 = smul.addr %s33, 4
          %s2154 = scalar_lea.hbm %s5, %s2153
          %s2156 = sshll.u32 %s2120, 4
          %s2157 = int_to_ptr.vmem [resolvable:$true] %s2156
          %s2158 = sshll.u32 %s2154, 4
          %s2159 = int_to_ptr.hbm [resolvable:$true] %s2158
          %2161 = dma.vmem_to_hbm [thread:$0]  %s2157, 64, %s2159, %s2117
        $region64: #{tpu_custom_call.1} parent=31 // pred_fallthru
          _
      $region32: #{tpu_custom_call.1} parent=5 // pred_fallthru
        _
      %p2162 = scmp.le.s32.totalorder 2, %s23
      // Predicated region
      $region65: #{tpu_custom_call.1} parent=5 // pred_check
        %p2163 = pneg %p2162
      $region66: #{tpu_custom_call.1} parent=5 // pred_check_branch
        %2165 = sbr.rel (%p2163) target = $region68
      $region67: #{tpu_custom_call.1} parent=5 // pred_region
        %s2166 = ssub.s32 %s23, 2
        // Predicated region
        $region69: #{tpu_custom_call.1} parent=67 // pred_check
          %p2167 = pneg %p141
        $region70: #{tpu_custom_call.1} parent=67 // pred_check_branch
          %2169 = sbr.rel (%p2167) target = $region72
        $region71: #{tpu_custom_call.1} parent=67 // pred_region
          %s2170 = sand.u32 %s126, 1
          %s2171 = scalar_lea.sflag [#allocation8], %s2170
          %s2172 = sand.u32 %s126, 1
          %s2173 = scalar_lea.vmem [#allocation11], %s2172
          %2175 = dma.done %s2171, 16
        $region72: #{tpu_custom_call.1} parent=67 // pred_fallthru
          _
        // Predicated region
        $region73: #{tpu_custom_call.1} parent=67 // pred_check
          %p2176 = pneg %p167
        $region74: #{tpu_custom_call.1} parent=67 // pred_check_branch
          %2178 = sbr.rel (%p2176) target = $region76
        $region75: #{tpu_custom_call.1} parent=67 // pred_region
          %s2179 = sand.u32 %s29, 1
          %s2180 = scalar_lea.sflag [#allocation13], %s2179
          %s2181 = sand.u32 %s152, 1
          %s2182 = smul.addr %s2181, 4
          %s2183 = scalar_lea.vmem [#allocation12], %s2182
          %2185 = dma.done %s2180, 64
        $region76: #{tpu_custom_call.1} parent=67 // pred_fallthru
          _
        // Predicated region
        $region77: #{tpu_custom_call.1} parent=67 // pred_check
          %p2186 = pneg %p193
        $region78: #{tpu_custom_call.1} parent=67 // pred_check_branch
          %2188 = sbr.rel (%p2186) target = $region80
        $region79: #{tpu_custom_call.1} parent=67 // pred_region
          %s2189 = sand.u32 %s29, 1
          %s2190 = scalar_lea.sflag [#allocation13], %s2189
          %s2191 = sand.u32 %s178, 1
          %s2192 = smul.addr %s2191, 4
          %s2193 = scalar_lea.vmem [#allocation14], %s2192
          %2195 = dma.done %s2190, 64
        $region80: #{tpu_custom_call.1} parent=67 // pred_fallthru
          _
      $region68: #{tpu_custom_call.1} parent=5 // pred_fallthru
        _
    $region6: #{tpu_custom_call.1} parent=1 // loop_footer
      %s27 = sadd.s32 1, %s23
    $region7: #{tpu_custom_call.1} parent=1 // loop_footer_branch
      %22 = sbr.rel target = $region3
    $region8: #{tpu_custom_call.1} parent=1 // loop_exit
      _
    %2196 = vsyncpa [#allocation7], 1
    %s2197 = scalar_lea.sflag [#allocation7], 1
    %2198 = vsyncpa %s2197, 1
    %2199 = vsyncpa [#allocation10], 1
    %2200 = vsyncpa [#allocation8], 1
    %s2201 = scalar_lea.sflag [#allocation8], 1
    %2202 = vsyncpa %s2201, 1
    %2203 = vsyncpa [#allocation13], 1
    %s2204 = scalar_lea.sflag [#allocation13], 1
    %2205 = vsyncpa %s2204, 1

</llo_original>
